<compile_context>
chip_gen: v7x
topology: tpu7x:2x2x1
jax: 0.10.0
libtpu: 0.0.40
codegen_flags: <defaults>
</compile_context>

<pallas_src>
import functools

import jax
import jax.numpy as jnp
from jax.experimental import pallas as pl
from jax.experimental.pallas import tpu as pltpu


def _round_up(x, m):
    return ((x + m - 1) // m) * m


def _cdiv(a, b):
    return -(-a // b)


def _pad_to(a, shape):
    return jnp.pad(a, [(0, s - d) for d, s in zip(a.shape, shape)])


# ----------------------------------------------------------------------------
# Pallas kernel: one target-node tile of a GATv2Conv layer (dense / masked)
#   score_ij = sum_c att[h,c] * leaky( (W_r x_i + b)_c + (W_l x_j)_c + (W_e e_ij)_c )
#   out_i    = sum_j softmax_j(score_ij) * (W_l x_j + b_l)
# All projections arrive precomputed; the kernel only does the [TI, NJ] score
# accumulation (VPU), softmax (VPU + EUP reciprocal) and aggregation (MXU).
# ----------------------------------------------------------------------------
def _gatv2_kernel(xl_ref, xlT_ref, xr_ref, nb_ref, ea_ref,
                  bias_ref, we_ref, attp_ref, out_ref, *, H, C):
    TI, NJ = nb_ref.shape
    HC = H * C
    HC_PAD = out_ref.shape[-1]
    E = ea_ref.shape[0]

    xl = xl_ref[...]                                  # [NJ, HC]  messages (f32)
    xlT = xlT_ref[...]                                # [HC, NJ]  lane-dense scores side
    xr = xr_ref[...]                                  # [TI, HC]  target-side term
    nb = nb_ref[...].astype(jnp.float32)              # [TI, NJ]  additive mask bias
    ea = [ea_ref[p].astype(jnp.float32) for p in range(E)]   # bf16 -> f32 once/tile

    lane = jax.lax.broadcasted_iota(jnp.int32, (1, HC), 1)

    out = jnp.zeros((TI, HC), jnp.float32)
    for h in range(H):                                # H, C small & static -> unrolled
        score = nb                                    # mask baked in as -1e30
        for c in range(C):
            k = h * C + c
            # edge embedding channel k: 3 broadcast FMAs (no [N,N,C] tensor)
            ee = ea[0] * we_ref[0, k]
            for p in range(1, E):
                ee = ee + ea[p] * we_ref[p, k]
            s = xr[:, k:k + 1] + xlT[k:k + 1, :] + ee
            # att * leaky_relu(s) folded into one select (attp[1] = 0.2*att)
            score = score + jnp.where(s > 0.0, attp_ref[0, k], attp_ref[1, k]) * s

        # Softmax over sources j; non-edges are -1e30 -> exp underflows to 0.
        score = score - jnp.max(score, axis=1, keepdims=True)
        e = jnp.exp(score)
        denom = jnp.sum(e, axis=1, keepdims=True)     # >= 1 (max element is exp(0))
        alpha = e * pl.reciprocal(denom, approx=True)  # EUP slot

        # Aggregate against the FULL xl (tiny MXU op); pick head's columns via mask.
        r = jnp.dot(alpha, xl, preferred_element_type=jnp.float32)   # [TI, HC]
        if H == 1:
            out = r
        else:
            sel = (lane >= h * C) & (lane < (h + 1) * C)
            out = out + jnp.where(sel, r, 0.0)

    if HC_PAD > HC:
        out = jnp.concatenate(
            [out, jnp.zeros((TI, HC_PAD - HC), jnp.float32)], axis=-1)
    out_ref[...] = out + bias_ref[...]                # lane-dense [TI, 128] store


def _vmem_limit_bytes(tile_i, n_j, hc, hc_pad, e_dim):
    """Derive the scoped-VMEM request from the actual per-step working set."""
    plane = tile_i * n_j
    per_step = (1 + e_dim) * plane * 2          # bf16 neg-bias + edge planes
    per_step += tile_i * hc * 4 + tile_i * hc_pad * 4   # xr tile + out tile
    resident = 2 * (n_j * hc * 4) + hc_pad * 4          # xl, xlT, bias
    temps = 8 * plane * 4                               # f32 [TI,NJ] temporaries
    est = 2 * per_step + 2 * resident + temps + (2 << 20)
    return int(min(max(est, 4 << 20), 100 << 20))


def gatv2_layer(x, adj, ea, params, *, heads, out_channels, input_leaky=None):
    N, F = x.shape
    H, C = heads, out_channels
    HC = H * C
    HC_PAD = _round_up(HC, 128)
    E_DIM = ea.shape[-1]

    # Inter-layer leaky_relu hoisted out of the kernel (done once, in XLA).
    if input_leaky is not None:
        x = jnp.where(x > 0, x, input_leaky * x)

    # Row tile: bf16 planes need 16-row granularity; prefer >=2 grid steps so
    # dimension_semantics=("parallel",) can feed both v7x TensorCores.
    ROW_ALIGN = 16
    n_rows = _round_up(N, ROW_ALIGN)
    if n_rows <= 256:
        TILE_I = max(ROW_ALIGN, _round_up(_cdiv(n_rows, 2), ROW_ALIGN))
    else:
        TILE_I = 128
    N_i = _round_up(N, TILE_I)                  # padded target axis
    N_j = _round_up(N, 128)                     # padded (lane-dense) source axis

    # ---- Hoisted projections (once per layer, plain XLA / MXU) --------------
    x_src = _pad_to(x, (N_j, F))
    x_tgt = _pad_to(x, (N_i, F))
    xl_nb = x_src @ params["wl"]                          # [N_j, HC]
    xl = xl_nb + params["bl"]                             # messages side
    xlT = xl_nb.T                                         # [HC, N_j] score side
    xr_b = x_tgt @ params["wr"] + params["br"] + params["bl"]   # [N_i, HC]

    # ---- bf16 mask/edge planes (dominant DMA stream) -------------------------
    adj_p = _pad_to(adj, (N_i, N_j))
    nb_p = jnp.where(adj_p > 0, 0.0, -1e30).astype(jnp.bfloat16)         # [Ni,Nj]
    ea_p = jnp.moveaxis(
        _pad_to(ea.astype(jnp.bfloat16), (N_i, N_j, E_DIM)), -1, 0)      # [E,Ni,Nj]

    bias_p = _pad_to(params["bias"], (1, HC_PAD))
    we = params["we"]                                     # [E, HC]  SMEM scalars
    att_flat = params["att"].reshape(1, HC)
    attp = jnp.concatenate([att_flat, att_flat * 0.2], axis=0)   # [2, HC] SMEM

    kernel = functools.partial(_gatv2_kernel, H=H, C=C)
    smem = pl.BlockSpec(memory_space=pltpu.MemorySpace.SMEM)

    out = pl.pallas_call(
        kernel,
        out_shape=jax.ShapeDtypeStruct((N_i, HC_PAD), jnp.float32),
        grid=(N_i // TILE_I,),
        in_specs=[
            pl.BlockSpec((N_j, HC), lambda i: (0, 0)),            # xl   (resident)
            pl.BlockSpec((HC, N_j), lambda i: (0, 0)),            # xlT  (resident)
            pl.BlockSpec((TILE_I, HC), lambda i: (i, 0)),         # xr_b tile
            pl.BlockSpec((TILE_I, N_j), lambda i: (i, 0)),        # neg-bias tile (bf16)
            pl.BlockSpec((E_DIM, TILE_I, N_j), lambda i: (0, i, 0)),  # edge planes (bf16)
            pl.BlockSpec((1, HC_PAD), lambda i: (0, 0)),          # bias (padded)
            smem,                                                 # we
            smem,                                                 # att / 0.2*att
        ],
        out_specs=pl.BlockSpec((TILE_I, HC_PAD), lambda i: (i, 0)),
        compiler_params=pltpu.CompilerParams(
            dimension_semantics=("parallel",),
            vmem_limit_bytes=_vmem_limit_bytes(TILE_I, N_j, HC, HC_PAD, E_DIM),
        ),
    )(xl, xlT, xr_b, nb_p, ea_p, bias_p, we, attp)

    return out[:N, :HC]


# ----------------------------------------------------------------------------
# Plain-JAX glue: params, graph densification, model wrapper, reference
# ----------------------------------------------------------------------------
def _glorot(key, shape):
    fan_in, fan_out = shape[-2], shape[-1]
    limit = jnp.sqrt(6.0 / (fan_in + fan_out))
    return jax.random.uniform(key, shape, jnp.float32, -limit, limit)


def init_gatv2_params(key, in_dim, out_channels, heads, edge_dim):
    ks = jax.random.split(key, 4)
    hc = heads * out_channels
    return {
        "wl": _glorot(ks[0], (in_dim, hc)),
        "bl": jnp.zeros((1, hc), jnp.float32),
        "wr": _glorot(ks[1], (in_dim, hc)),
        "br": jnp.zeros((1, hc), jnp.float32),
        "we": _glorot(ks[2], (edge_dim, hc)),        # lin_edge has no bias in PyG
        "att": _glorot(ks[3], (heads, out_channels)),
        "bias": jnp.zeros((1, hc), jnp.float32),
    }


def build_dense_graph(edge_index, edge_attr, num_nodes):
    """Densify edge list and add self-loops with PyG fill_value='mean'."""
    # TODO(synk): duplicate edges silently collapse here (differs from PyG).
    src, dst = edge_index[0], edge_index[1]
    E = edge_attr.shape[-1]
    adj = jnp.zeros((num_nodes, num_nodes), jnp.float32).at[dst, src].set(1.0)
    ea = jnp.zeros((num_nodes, num_nodes, E), jnp.float32).at[dst, src].set(edge_attr)
    deg = jnp.zeros((num_nodes,), jnp.float32).at[dst].add(1.0)
    sums = jnp.zeros((num_nodes, E), jnp.float32).at[dst].add(edge_attr)
    loop_attr = sums / jnp.maximum(deg, 1.0)[:, None]
    diag = jnp.arange(num_nodes)
    adj = adj.at[diag, diag].set(1.0)
    ea = ea.at[diag, diag].set(loop_attr)
    return adj, ea


def gat_forward(x, adj, ea, params1, params2, *, heads, embedding_size):
    h = gatv2_layer(x, adj, ea, params1, heads=heads, out_channels=embedding_size)
    # F.leaky_relu (slope 0.01) between the convs is hoisted into layer 2's wrapper.
    h = gatv2_layer(h, adj, ea, params2, heads=1, out_channels=embedding_size,
                    input_leaky=0.01)
    return h


def _gatv2_ref(x, adj, ea, p, heads, out_channels, input_leaky=None):
    """Pure-JAX reference of the same dense GATv2 math (for validation)."""
    N = x.shape[0]
    H, C = heads, out_channels
    if input_leaky is not None:
        x = jnp.where(x > 0, x, input_leaky * x)
    xl = x @ p["wl"] + p["bl"]
    xr = x @ p["wr"] + p["br"]
    eemb = ea.reshape(N * N, -1) @ p["we"]
    mask = adj > 0
    outs = []
    for h in range(H):
        sl = slice(h * C, (h + 1) * C)
        s = xr[:, None, sl] + xl[None, :, sl] + eemb[:, sl].reshape(N, N, C)
        s = jnp.where(s > 0, s, 0.2 * s)
        score = jnp.sum(s * p["att"][h], axis=-1)
        score = jnp.where(mask, score, -1e30)
        score = score - jnp.max(score, axis=1, keepdims=True)
        e = jnp.where(mask, jnp.exp(score), 0.0)
        alpha = e / jnp.sum(e, axis=1, keepdims=True)
        outs.append(alpha @ xl[:, sl])
    out = outs[0] if H == 1 else jnp.concatenate(outs, axis=-1)
    return out + p["bias"]


if __name__ == "__main__":
    # Small synthetic graph consistent with GAT(num_node_features=4,
    # embedding_size=8, heads=2).
    NUM_NODES = 16
    NUM_NODE_FEATURES = 4
    EMBEDDING_SIZE = 8
    HEADS = 2
    EDGE_DIM = 3

    key = jax.random.PRNGKey(0)
    k_x, k_ea, k_p1, k_p2 = jax.random.split(key, 4)

    x = jax.random.normal(k_x, (NUM_NODES, NUM_NODE_FEATURES), jnp.float32)

    # Directed ring + skip edges (no self-loops, no duplicates): 32 edges.
    src = jnp.concatenate([jnp.arange(NUM_NODES), jnp.arange(NUM_NODES)])
    dst = jnp.concatenate([(jnp.arange(NUM_NODES) + 1) % NUM_NODES,
                           (jnp.arange(NUM_NODES) + 3) % NUM_NODES])
    edge_index = jnp.stack([src, dst]).astype(jnp.int32)          # [2, 32]
    edge_attr = jax.random.normal(k_ea, (edge_index.shape[1], EDGE_DIM), jnp.float32)

    adj, ea = build_dense_graph(edge_index, edge_attr, NUM_NODES)

    params1 = init_gatv2_params(k_p1, NUM_NODE_FEATURES, EMBEDDING_SIZE, HEADS, EDGE_DIM)
    params2 = init_gatv2_params(k_p2, HEADS * EMBEDDING_SIZE, EMBEDDING_SIZE, 1, EDGE_DIM)

    fwd = jax.jit(functools.partial(gat_forward, heads=HEADS,
                                    embedding_size=EMBEDDING_SIZE))
    out = jax.block_until_ready(fwd(x, adj, ea, params1, params2))
    assert out.shape == (NUM_NODES, EMBEDDING_SIZE), out.shape

    # Validate against the pure-JAX reference.  The kernel stores the edge-attr
    # planes in bf16 (perf: halves the dominant DMA stream), so the reference
    # consumes the identically-quantized planes — the check then validates the
    # kernel math itself at f32 accuracy.
    ea_q = ea.astype(jnp.bfloat16).astype(jnp.float32)
    h_ref = _gatv2_ref(x, adj, ea_q, params1, HEADS, EMBEDDING_SIZE)
    ref = _gatv2_ref(h_ref, adj, ea_q, params2, 1, EMBEDDING_SIZE, input_leaky=0.01)
    if not jnp.allclose(out, ref, atol=1e-2, rtol=1e-2):
        raise AssertionError("Pallas GATv2 output mismatch vs reference")

    print("KERNEL_OK")
</pallas_src>

<mosaic_0001>
module attributes {stable_mosaic.version = 11 : i64} {
  func.func @_gatv2_kernel(%arg0: i32, %arg1: memref<128x8xf32, #tpu.memory_space<vmem>>, %arg2: memref<8x128xf32, #tpu.memory_space<vmem>>, %arg3: memref<16x8xf32, #tpu.memory_space<vmem>>, %arg4: memref<16x128xbf16, #tpu.memory_space<vmem>>, %arg5: memref<3x16x128xbf16, #tpu.memory_space<vmem>>, %arg6: memref<1x128xf32, #tpu.memory_space<vmem>>, %arg7: memref<3x8xf32, #tpu.memory_space<smem>>, %arg8: memref<2x8xf32, #tpu.memory_space<smem>>, %arg9: memref<16x128xf32, #tpu.memory_space<vmem>>) attributes {dimension_semantics = [#tpu.dimension_semantics<parallel>], iteration_bounds = array<i64: 1>, scalar_prefetch = 0 : i64, scratch_operands = 0 : i64, tpu.core_type = #tpu.core_type<tc>, window_params = [{pipeline_mode = #tpu.pipeline_mode<synchronous>, transform_indices = @transform_0, window_bounds = array<i64: 128, 8>}, {pipeline_mode = #tpu.pipeline_mode<synchronous>, transform_indices = @transform_1, window_bounds = array<i64: 8, 128>}, {transform_indices = @transform_2, window_bounds = array<i64: 16, 8>}, {transform_indices = @transform_3, window_bounds = array<i64: 16, 128>}, {transform_indices = @transform_4, window_bounds = array<i64: 3, 16, 128>}, {pipeline_mode = #tpu.pipeline_mode<synchronous>, transform_indices = @transform_5, window_bounds = array<i64: 1, 128>}, {transform_indices = @transform_6, window_bounds = array<i64: 3, 8>}, {transform_indices = @transform_7, window_bounds = array<i64: 2, 8>}, {transform_indices = @transform_8, window_bounds = array<i64: 16, 128>}]} {
    %c0 = arith.constant 0 : index
    %c0_0 = arith.constant 0 : index
    %0 = vector.load %arg1[%c0, %c0_0] : memref<128x8xf32, #tpu.memory_space<vmem>>, vector<128x8xf32>
    %c0_1 = arith.constant 0 : index
    %c0_2 = arith.constant 0 : index
    %1 = vector.load %arg2[%c0_1, %c0_2] : memref<8x128xf32, #tpu.memory_space<vmem>>, vector<8x128xf32>
    %c0_3 = arith.constant 0 : index
    %c0_4 = arith.constant 0 : index
    %2 = vector.load %arg3[%c0_3, %c0_4] : memref<16x8xf32, #tpu.memory_space<vmem>>, vector<16x8xf32>
    %c0_5 = arith.constant 0 : index
    %c0_6 = arith.constant 0 : index
    %3 = vector.load %arg4[%c0_5, %c0_6] : memref<16x128xbf16, #tpu.memory_space<vmem>>, vector<16x128xbf16>
    %4 = arith.extf %3 : vector<16x128xbf16> to vector<16x128xf32>
    %c0_7 = arith.constant 0 : index
    %c0_8 = arith.constant 0 : index
    %c0_9 = arith.constant 0 : index
    %5 = vector.load %arg5[%c0_7, %c0_8, %c0_9] : memref<3x16x128xbf16, #tpu.memory_space<vmem>>, vector<1x16x128xbf16>
    %6 = vector.shape_cast %5 : vector<1x16x128xbf16> to vector<16x128xbf16>
    %7 = arith.extf %6 : vector<16x128xbf16> to vector<16x128xf32>
    %c1 = arith.constant 1 : index
    %c0_10 = arith.constant 0 : index
    %c0_11 = arith.constant 0 : index
    %8 = vector.load %arg5[%c1, %c0_10, %c0_11] : memref<3x16x128xbf16, #tpu.memory_space<vmem>>, vector<1x16x128xbf16>
    %9 = vector.shape_cast %8 : vector<1x16x128xbf16> to vector<16x128xbf16>
    %10 = arith.extf %9 : vector<16x128xbf16> to vector<16x128xf32>
    %c2 = arith.constant 2 : index
    %c0_12 = arith.constant 0 : index
    %c0_13 = arith.constant 0 : index
    %11 = vector.load %arg5[%c2, %c0_12, %c0_13] : memref<3x16x128xbf16, #tpu.memory_space<vmem>>, vector<1x16x128xbf16>
    %12 = vector.shape_cast %11 : vector<1x16x128xbf16> to vector<16x128xbf16>
    %13 = arith.extf %12 : vector<16x128xbf16> to vector<16x128xf32>
    %c0_14 = arith.constant 0 : index
    %c0_15 = arith.constant 0 : index
    %14 = memref.load %arg7[%c0_14, %c0_15] : memref<3x8xf32, #tpu.memory_space<smem>>
    %15 = vector.broadcast %14 : f32 to vector<16x128xf32>
    %16 = arith.mulf %7, %15 : vector<16x128xf32>
    %c1_16 = arith.constant 1 : index
    %c0_17 = arith.constant 0 : index
    %17 = memref.load %arg7[%c1_16, %c0_17] : memref<3x8xf32, #tpu.memory_space<smem>>
    %18 = vector.broadcast %17 : f32 to vector<16x128xf32>
    %19 = arith.mulf %10, %18 : vector<16x128xf32>
    %20 = arith.addf %16, %19 : vector<16x128xf32>
    %c2_18 = arith.constant 2 : index
    %c0_19 = arith.constant 0 : index
    %21 = memref.load %arg7[%c2_18, %c0_19] : memref<3x8xf32, #tpu.memory_space<smem>>
    %22 = vector.broadcast %21 : f32 to vector<16x128xf32>
    %23 = arith.mulf %13, %22 : vector<16x128xf32>
    %24 = arith.addf %20, %23 : vector<16x128xf32>
    %25 = vector.extract_strided_slice %2 {offsets = [0, 0], sizes = [16, 1], strides = [1, 1]} : vector<16x8xf32> to vector<16x1xf32>
    %26 = vector.extract_strided_slice %1 {offsets = [0, 0], sizes = [1, 128], strides = [1, 1]} : vector<8x128xf32> to vector<1x128xf32>
    %27 = vector.broadcast %25 : vector<16x1xf32> to vector<16x128xf32>
    %28 = vector.broadcast %26 : vector<1x128xf32> to vector<16x128xf32>
    %29 = arith.addf %27, %28 : vector<16x128xf32>
    %30 = arith.addf %29, %24 : vector<16x128xf32>
    %cst = arith.constant 0.000000e+00 : f32
    %31 = vector.broadcast %cst : f32 to vector<16x128xf32>
    %32 = arith.cmpf ogt, %30, %31 : vector<16x128xf32>
    %c0_20 = arith.constant 0 : index
    %c0_21 = arith.constant 0 : index
    %33 = memref.load %arg8[%c0_20, %c0_21] : memref<2x8xf32, #tpu.memory_space<smem>>
    %c1_22 = arith.constant 1 : index
    %c0_23 = arith.constant 0 : index
    %34 = memref.load %arg8[%c1_22, %c0_23] : memref<2x8xf32, #tpu.memory_space<smem>>
    %35 = vector.broadcast %33 : f32 to vector<16x128xf32>
    %36 = vector.broadcast %34 : f32 to vector<16x128xf32>
    %37 = arith.select %32, %35, %36 : vector<16x128xi1>, vector<16x128xf32>
    %38 = arith.mulf %37, %30 : vector<16x128xf32>
    %39 = arith.addf %4, %38 : vector<16x128xf32>
    %c0_24 = arith.constant 0 : index
    %c1_25 = arith.constant 1 : index
    %40 = memref.load %arg7[%c0_24, %c1_25] : memref<3x8xf32, #tpu.memory_space<smem>>
    %41 = vector.broadcast %40 : f32 to vector<16x128xf32>
    %42 = arith.mulf %7, %41 : vector<16x128xf32>
    %c1_26 = arith.constant 1 : index
    %c1_27 = arith.constant 1 : index
    %43 = memref.load %arg7[%c1_26, %c1_27] : memref<3x8xf32, #tpu.memory_space<smem>>
    %44 = vector.broadcast %43 : f32 to vector<16x128xf32>
    %45 = arith.mulf %10, %44 : vector<16x128xf32>
    %46 = arith.addf %42, %45 : vector<16x128xf32>
    %c2_28 = arith.constant 2 : index
    %c1_29 = arith.constant 1 : index
    %47 = memref.load %arg7[%c2_28, %c1_29] : memref<3x8xf32, #tpu.memory_space<smem>>
    %48 = vector.broadcast %47 : f32 to vector<16x128xf32>
    %49 = arith.mulf %13, %48 : vector<16x128xf32>
    %50 = arith.addf %46, %49 : vector<16x128xf32>
    %51 = vector.extract_strided_slice %2 {offsets = [0, 1], sizes = [16, 1], strides = [1, 1]} : vector<16x8xf32> to vector<16x1xf32>
    %52 = vector.extract_strided_slice %1 {offsets = [1, 0], sizes = [1, 128], strides = [1, 1]} : vector<8x128xf32> to vector<1x128xf32>
    %53 = vector.broadcast %51 : vector<16x1xf32> to vector<16x128xf32>
    %54 = vector.broadcast %52 : vector<1x128xf32> to vector<16x128xf32>
    %55 = arith.addf %53, %54 : vector<16x128xf32>
    %56 = arith.addf %55, %50 : vector<16x128xf32>
    %cst_30 = arith.constant 0.000000e+00 : f32
    %57 = vector.broadcast %cst_30 : f32 to vector<16x128xf32>
    %58 = arith.cmpf ogt, %56, %57 : vector<16x128xf32>
    %c0_31 = arith.constant 0 : index
    %c1_32 = arith.constant 1 : index
    %59 = memref.load %arg8[%c0_31, %c1_32] : memref<2x8xf32, #tpu.memory_space<smem>>
    %c1_33 = arith.constant 1 : index
    %c1_34 = arith.constant 1 : index
    %60 = memref.load %arg8[%c1_33, %c1_34] : memref<2x8xf32, #tpu.memory_space<smem>>
    %61 = vector.broadcast %59 : f32 to vector<16x128xf32>
    %62 = vector.broadcast %60 : f32 to vector<16x128xf32>
    %63 = arith.select %58, %61, %62 : vector<16x128xi1>, vector<16x128xf32>
    %64 = arith.mulf %63, %56 : vector<16x128xf32>
    %65 = arith.addf %39, %64 : vector<16x128xf32>
    %c0_35 = arith.constant 0 : index
    %c2_36 = arith.constant 2 : index
    %66 = memref.load %arg7[%c0_35, %c2_36] : memref<3x8xf32, #tpu.memory_space<smem>>
    %67 = vector.broadcast %66 : f32 to vector<16x128xf32>
    %68 = arith.mulf %7, %67 : vector<16x128xf32>
    %c1_37 = arith.constant 1 : index
    %c2_38 = arith.constant 2 : index
    %69 = memref.load %arg7[%c1_37, %c2_38] : memref<3x8xf32, #tpu.memory_space<smem>>
    %70 = vector.broadcast %69 : f32 to vector<16x128xf32>
    %71 = arith.mulf %10, %70 : vector<16x128xf32>
    %72 = arith.addf %68, %71 : vector<16x128xf32>
    %c2_39 = arith.constant 2 : index
    %c2_40 = arith.constant 2 : index
    %73 = memref.load %arg7[%c2_39, %c2_40] : memref<3x8xf32, #tpu.memory_space<smem>>
    %74 = vector.broadcast %73 : f32 to vector<16x128xf32>
    %75 = arith.mulf %13, %74 : vector<16x128xf32>
    %76 = arith.addf %72, %75 : vector<16x128xf32>
    %77 = vector.extract_strided_slice %2 {offsets = [0, 2], sizes = [16, 1], strides = [1, 1]} : vector<16x8xf32> to vector<16x1xf32>
    %78 = vector.extract_strided_slice %1 {offsets = [2, 0], sizes = [1, 128], strides = [1, 1]} : vector<8x128xf32> to vector<1x128xf32>
    %79 = vector.broadcast %77 : vector<16x1xf32> to vector<16x128xf32>
    %80 = vector.broadcast %78 : vector<1x128xf32> to vector<16x128xf32>
    %81 = arith.addf %79, %80 : vector<16x128xf32>
    %82 = arith.addf %81, %76 : vector<16x128xf32>
    %cst_41 = arith.constant 0.000000e+00 : f32
    %83 = vector.broadcast %cst_41 : f32 to vector<16x128xf32>
    %84 = arith.cmpf ogt, %82, %83 : vector<16x128xf32>
    %c0_42 = arith.constant 0 : index
    %c2_43 = arith.constant 2 : index
    %85 = memref.load %arg8[%c0_42, %c2_43] : memref<2x8xf32, #tpu.memory_space<smem>>
    %c1_44 = arith.constant 1 : index
    %c2_45 = arith.constant 2 : index
    %86 = memref.load %arg8[%c1_44, %c2_45] : memref<2x8xf32, #tpu.memory_space<smem>>
    %87 = vector.broadcast %85 : f32 to vector<16x128xf32>
    %88 = vector.broadcast %86 : f32 to vector<16x128xf32>
    %89 = arith.select %84, %87, %88 : vector<16x128xi1>, vector<16x128xf32>
    %90 = arith.mulf %89, %82 : vector<16x128xf32>
    %91 = arith.addf %65, %90 : vector<16x128xf32>
    %c0_46 = arith.constant 0 : index
    %c3 = arith.constant 3 : index
    %92 = memref.load %arg7[%c0_46, %c3] : memref<3x8xf32, #tpu.memory_space<smem>>
    %93 = vector.broadcast %92 : f32 to vector<16x128xf32>
    %94 = arith.mulf %7, %93 : vector<16x128xf32>
    %c1_47 = arith.constant 1 : index
    %c3_48 = arith.constant 3 : index
    %95 = memref.load %arg7[%c1_47, %c3_48] : memref<3x8xf32, #tpu.memory_space<smem>>
    %96 = vector.broadcast %95 : f32 to vector<16x128xf32>
    %97 = arith.mulf %10, %96 : vector<16x128xf32>
    %98 = arith.addf %94, %97 : vector<16x128xf32>
    %c2_49 = arith.constant 2 : index
    %c3_50 = arith.constant 3 : index
    %99 = memref.load %arg7[%c2_49, %c3_50] : memref<3x8xf32, #tpu.memory_space<smem>>
    %100 = vector.broadcast %99 : f32 to vector<16x128xf32>
    %101 = arith.mulf %13, %100 : vector<16x128xf32>
    %102 = arith.addf %98, %101 : vector<16x128xf32>
    %103 = vector.extract_strided_slice %2 {offsets = [0, 3], sizes = [16, 1], strides = [1, 1]} : vector<16x8xf32> to vector<16x1xf32>
    %104 = vector.extract_strided_slice %1 {offsets = [3, 0], sizes = [1, 128], strides = [1, 1]} : vector<8x128xf32> to vector<1x128xf32>
    %105 = vector.broadcast %103 : vector<16x1xf32> to vector<16x128xf32>
    %106 = vector.broadcast %104 : vector<1x128xf32> to vector<16x128xf32>
    %107 = arith.addf %105, %106 : vector<16x128xf32>
    %108 = arith.addf %107, %102 : vector<16x128xf32>
    %cst_51 = arith.constant 0.000000e+00 : f32
    %109 = vector.broadcast %cst_51 : f32 to vector<16x128xf32>
    %110 = arith.cmpf ogt, %108, %109 : vector<16x128xf32>
    %c0_52 = arith.constant 0 : index
    %c3_53 = arith.constant 3 : index
    %111 = memref.load %arg8[%c0_52, %c3_53] : memref<2x8xf32, #tpu.memory_space<smem>>
    %c1_54 = arith.constant 1 : index
    %c3_55 = arith.constant 3 : index
    %112 = memref.load %arg8[%c1_54, %c3_55] : memref<2x8xf32, #tpu.memory_space<smem>>
    %113 = vector.broadcast %111 : f32 to vector<16x128xf32>
    %114 = vector.broadcast %112 : f32 to vector<16x128xf32>
    %115 = arith.select %110, %113, %114 : vector<16x128xi1>, vector<16x128xf32>
    %116 = arith.mulf %115, %108 : vector<16x128xf32>
    %117 = arith.addf %91, %116 : vector<16x128xf32>
    %c0_56 = arith.constant 0 : index
    %c4 = arith.constant 4 : index
    %118 = memref.load %arg7[%c0_56, %c4] : memref<3x8xf32, #tpu.memory_space<smem>>
    %119 = vector.broadcast %118 : f32 to vector<16x128xf32>
    %120 = arith.mulf %7, %119 : vector<16x128xf32>
    %c1_57 = arith.constant 1 : index
    %c4_58 = arith.constant 4 : index
    %121 = memref.load %arg7[%c1_57, %c4_58] : memref<3x8xf32, #tpu.memory_space<smem>>
    %122 = vector.broadcast %121 : f32 to vector<16x128xf32>
    %123 = arith.mulf %10, %122 : vector<16x128xf32>
    %124 = arith.addf %120, %123 : vector<16x128xf32>
    %c2_59 = arith.constant 2 : index
    %c4_60 = arith.constant 4 : index
    %125 = memref.load %arg7[%c2_59, %c4_60] : memref<3x8xf32, #tpu.memory_space<smem>>
    %126 = vector.broadcast %125 : f32 to vector<16x128xf32>
    %127 = arith.mulf %13, %126 : vector<16x128xf32>
    %128 = arith.addf %124, %127 : vector<16x128xf32>
    %129 = vector.extract_strided_slice %2 {offsets = [0, 4], sizes = [16, 1], strides = [1, 1]} : vector<16x8xf32> to vector<16x1xf32>
    %130 = vector.extract_strided_slice %1 {offsets = [4, 0], sizes = [1, 128], strides = [1, 1]} : vector<8x128xf32> to vector<1x128xf32>
    %131 = vector.broadcast %129 : vector<16x1xf32> to vector<16x128xf32>
    %132 = vector.broadcast %130 : vector<1x128xf32> to vector<16x128xf32>
    %133 = arith.addf %131, %132 : vector<16x128xf32>
    %134 = arith.addf %133, %128 : vector<16x128xf32>
    %cst_61 = arith.constant 0.000000e+00 : f32
    %135 = vector.broadcast %cst_61 : f32 to vector<16x128xf32>
    %136 = arith.cmpf ogt, %134, %135 : vector<16x128xf32>
    %c0_62 = arith.constant 0 : index
    %c4_63 = arith.constant 4 : index
    %137 = memref.load %arg8[%c0_62, %c4_63] : memref<2x8xf32, #tpu.memory_space<smem>>
    %c1_64 = arith.constant 1 : index
    %c4_65 = arith.constant 4 : index
    %138 = memref.load %arg8[%c1_64, %c4_65] : memref<2x8xf32, #tpu.memory_space<smem>>
    %139 = vector.broadcast %137 : f32 to vector<16x128xf32>
    %140 = vector.broadcast %138 : f32 to vector<16x128xf32>
    %141 = arith.select %136, %139, %140 : vector<16x128xi1>, vector<16x128xf32>
    %142 = arith.mulf %141, %134 : vector<16x128xf32>
    %143 = arith.addf %117, %142 : vector<16x128xf32>
    %c0_66 = arith.constant 0 : index
    %c5 = arith.constant 5 : index
    %144 = memref.load %arg7[%c0_66, %c5] : memref<3x8xf32, #tpu.memory_space<smem>>
    %145 = vector.broadcast %144 : f32 to vector<16x128xf32>
    %146 = arith.mulf %7, %145 : vector<16x128xf32>
    %c1_67 = arith.constant 1 : index
    %c5_68 = arith.constant 5 : index
    %147 = memref.load %arg7[%c1_67, %c5_68] : memref<3x8xf32, #tpu.memory_space<smem>>
    %148 = vector.broadcast %147 : f32 to vector<16x128xf32>
    %149 = arith.mulf %10, %148 : vector<16x128xf32>
    %150 = arith.addf %146, %149 : vector<16x128xf32>
    %c2_69 = arith.constant 2 : index
    %c5_70 = arith.constant 5 : index
    %151 = memref.load %arg7[%c2_69, %c5_70] : memref<3x8xf32, #tpu.memory_space<smem>>
    %152 = vector.broadcast %151 : f32 to vector<16x128xf32>
    %153 = arith.mulf %13, %152 : vector<16x128xf32>
    %154 = arith.addf %150, %153 : vector<16x128xf32>
    %155 = vector.extract_strided_slice %2 {offsets = [0, 5], sizes = [16, 1], strides = [1, 1]} : vector<16x8xf32> to vector<16x1xf32>
    %156 = vector.extract_strided_slice %1 {offsets = [5, 0], sizes = [1, 128], strides = [1, 1]} : vector<8x128xf32> to vector<1x128xf32>
    %157 = vector.broadcast %155 : vector<16x1xf32> to vector<16x128xf32>
    %158 = vector.broadcast %156 : vector<1x128xf32> to vector<16x128xf32>
    %159 = arith.addf %157, %158 : vector<16x128xf32>
    %160 = arith.addf %159, %154 : vector<16x128xf32>
    %cst_71 = arith.constant 0.000000e+00 : f32
    %161 = vector.broadcast %cst_71 : f32 to vector<16x128xf32>
    %162 = arith.cmpf ogt, %160, %161 : vector<16x128xf32>
    %c0_72 = arith.constant 0 : index
    %c5_73 = arith.constant 5 : index
    %163 = memref.load %arg8[%c0_72, %c5_73] : memref<2x8xf32, #tpu.memory_space<smem>>
    %c1_74 = arith.constant 1 : index
    %c5_75 = arith.constant 5 : index
    %164 = memref.load %arg8[%c1_74, %c5_75] : memref<2x8xf32, #tpu.memory_space<smem>>
    %165 = vector.broadcast %163 : f32 to vector<16x128xf32>
    %166 = vector.broadcast %164 : f32 to vector<16x128xf32>
    %167 = arith.select %162, %165, %166 : vector<16x128xi1>, vector<16x128xf32>
    %168 = arith.mulf %167, %160 : vector<16x128xf32>
    %169 = arith.addf %143, %168 : vector<16x128xf32>
    %c0_76 = arith.constant 0 : index
    %c6 = arith.constant 6 : index
    %170 = memref.load %arg7[%c0_76, %c6] : memref<3x8xf32, #tpu.memory_space<smem>>
    %171 = vector.broadcast %170 : f32 to vector<16x128xf32>
    %172 = arith.mulf %7, %171 : vector<16x128xf32>
    %c1_77 = arith.constant 1 : index
    %c6_78 = arith.constant 6 : index
    %173 = memref.load %arg7[%c1_77, %c6_78] : memref<3x8xf32, #tpu.memory_space<smem>>
    %174 = vector.broadcast %173 : f32 to vector<16x128xf32>
    %175 = arith.mulf %10, %174 : vector<16x128xf32>
    %176 = arith.addf %172, %175 : vector<16x128xf32>
    %c2_79 = arith.constant 2 : index
    %c6_80 = arith.constant 6 : index
    %177 = memref.load %arg7[%c2_79, %c6_80] : memref<3x8xf32, #tpu.memory_space<smem>>
    %178 = vector.broadcast %177 : f32 to vector<16x128xf32>
    %179 = arith.mulf %13, %178 : vector<16x128xf32>
    %180 = arith.addf %176, %179 : vector<16x128xf32>
    %181 = vector.extract_strided_slice %2 {offsets = [0, 6], sizes = [16, 1], strides = [1, 1]} : vector<16x8xf32> to vector<16x1xf32>
    %182 = vector.extract_strided_slice %1 {offsets = [6, 0], sizes = [1, 128], strides = [1, 1]} : vector<8x128xf32> to vector<1x128xf32>
    %183 = vector.broadcast %181 : vector<16x1xf32> to vector<16x128xf32>
    %184 = vector.broadcast %182 : vector<1x128xf32> to vector<16x128xf32>
    %185 = arith.addf %183, %184 : vector<16x128xf32>
    %186 = arith.addf %185, %180 : vector<16x128xf32>
    %cst_81 = arith.constant 0.000000e+00 : f32
    %187 = vector.broadcast %cst_81 : f32 to vector<16x128xf32>
    %188 = arith.cmpf ogt, %186, %187 : vector<16x128xf32>
    %c0_82 = arith.constant 0 : index
    %c6_83 = arith.constant 6 : index
    %189 = memref.load %arg8[%c0_82, %c6_83] : memref<2x8xf32, #tpu.memory_space<smem>>
    %c1_84 = arith.constant 1 : index
    %c6_85 = arith.constant 6 : index
    %190 = memref.load %arg8[%c1_84, %c6_85] : memref<2x8xf32, #tpu.memory_space<smem>>
    %191 = vector.broadcast %189 : f32 to vector<16x128xf32>
    %192 = vector.broadcast %190 : f32 to vector<16x128xf32>
    %193 = arith.select %188, %191, %192 : vector<16x128xi1>, vector<16x128xf32>
    %194 = arith.mulf %193, %186 : vector<16x128xf32>
    %195 = arith.addf %169, %194 : vector<16x128xf32>
    %c0_86 = arith.constant 0 : index
    %c7 = arith.constant 7 : index
    %196 = memref.load %arg7[%c0_86, %c7] : memref<3x8xf32, #tpu.memory_space<smem>>
    %197 = vector.broadcast %196 : f32 to vector<16x128xf32>
    %198 = arith.mulf %7, %197 : vector<16x128xf32>
    %c1_87 = arith.constant 1 : index
    %c7_88 = arith.constant 7 : index
    %199 = memref.load %arg7[%c1_87, %c7_88] : memref<3x8xf32, #tpu.memory_space<smem>>
    %200 = vector.broadcast %199 : f32 to vector<16x128xf32>
    %201 = arith.mulf %10, %200 : vector<16x128xf32>
    %202 = arith.addf %198, %201 : vector<16x128xf32>
    %c2_89 = arith.constant 2 : index
    %c7_90 = arith.constant 7 : index
    %203 = memref.load %arg7[%c2_89, %c7_90] : memref<3x8xf32, #tpu.memory_space<smem>>
    %204 = vector.broadcast %203 : f32 to vector<16x128xf32>
    %205 = arith.mulf %13, %204 : vector<16x128xf32>
    %206 = arith.addf %202, %205 : vector<16x128xf32>
    %207 = vector.extract_strided_slice %2 {offsets = [0, 7], sizes = [16, 1], strides = [1, 1]} : vector<16x8xf32> to vector<16x1xf32>
    %208 = vector.extract_strided_slice %1 {offsets = [7, 0], sizes = [1, 128], strides = [1, 1]} : vector<8x128xf32> to vector<1x128xf32>
    %209 = vector.broadcast %207 : vector<16x1xf32> to vector<16x128xf32>
    %210 = vector.broadcast %208 : vector<1x128xf32> to vector<16x128xf32>
    %211 = arith.addf %209, %210 : vector<16x128xf32>
    %212 = arith.addf %211, %206 : vector<16x128xf32>
    %cst_91 = arith.constant 0.000000e+00 : f32
    %213 = vector.broadcast %cst_91 : f32 to vector<16x128xf32>
    %214 = arith.cmpf ogt, %212, %213 : vector<16x128xf32>
    %c0_92 = arith.constant 0 : index
    %c7_93 = arith.constant 7 : index
    %215 = memref.load %arg8[%c0_92, %c7_93] : memref<2x8xf32, #tpu.memory_space<smem>>
    %c1_94 = arith.constant 1 : index
    %c7_95 = arith.constant 7 : index
    %216 = memref.load %arg8[%c1_94, %c7_95] : memref<2x8xf32, #tpu.memory_space<smem>>
    %217 = vector.broadcast %215 : f32 to vector<16x128xf32>
    %218 = vector.broadcast %216 : f32 to vector<16x128xf32>
    %219 = arith.select %214, %217, %218 : vector<16x128xi1>, vector<16x128xf32>
    %220 = arith.mulf %219, %212 : vector<16x128xf32>
    %221 = arith.addf %195, %220 : vector<16x128xf32>
    %cst_96 = arith.constant dense<0xFF800000> : vector<16xf32>
    %222 = vector.multi_reduction <maximumf>, %221, %cst_96 [1] : vector<16x128xf32> to vector<16xf32>
    %223 = vector.shape_cast %222 : vector<16xf32> to vector<16x1xf32>
    %224 = vector.broadcast %223 : vector<16x1xf32> to vector<16x128xf32>
    %225 = arith.subf %221, %224 : vector<16x128xf32>
    %226 = math.exp %225 : vector<16x128xf32>
    %cst_97 = arith.constant dense<0.000000e+00> : vector<16xf32>
    %227 = vector.multi_reduction <add>, %226, %cst_97 [1] : vector<16x128xf32> to vector<16xf32>
    %228 = vector.shape_cast %227 : vector<16xf32> to vector<16x1xf32>
    %229 = tpu.reciprocal %228 {approx = true} : vector<16x1xf32> -> vector<16x1xf32>
    %230 = vector.broadcast %229 : vector<16x1xf32> to vector<16x128xf32>
    %231 = arith.mulf %226, %230 : vector<16x128xf32>
    %cst_98 = arith.constant dense<0.000000e+00> : vector<16x8xf32>
    %232 = tpu.matmul %231, %0, %cst_98 {dimension_numbers = #tpu.dot_dimension_numbers<[1], [0], [0], [1], [0, 0, 1, 1], [], []>} : vector<16x128xf32>, vector<128x8xf32>, vector<16x8xf32> -> vector<16x8xf32>
    %cst_99 = arith.constant 0.000000e+00 : f32
    %233 = vector.broadcast %cst_99 : f32 to vector<16x120xf32>
    %234 = tpu.concatenate %232, %233 in 1 : vector<16x8xf32>, vector<16x120xf32> -> vector<16x128xf32>
    %c0_100 = arith.constant 0 : index
    %c0_101 = arith.constant 0 : index
    %235 = vector.load %arg6[%c0_100, %c0_101] : memref<1x128xf32, #tpu.memory_space<vmem>>, vector<1x128xf32>
    %236 = vector.broadcast %235 : vector<1x128xf32> to vector<16x128xf32>
    %237 = arith.addf %234, %236 : vector<16x128xf32>
    %c0_102 = arith.constant 0 : index
    %c0_103 = arith.constant 0 : index
    %238 = vector.load %arg9[%c0_102, %c0_103] : memref<16x128xf32, #tpu.memory_space<vmem>>, vector<16x128xf32>
    tpu.vector_store %arg9[%c0_102, %c0_103], %237 {strides = array<i32>} : memref<16x128xf32, #tpu.memory_space<vmem>>, vector<16x128xf32>,
    return
  }
  func.func @transform_0(%arg0: i32) -> (i32, i32) {
    %c0_i32 = arith.constant 0 : i32
    %c0_i32_0 = arith.constant 0 : i32
    %c0_i32_1 = arith.constant 0 : i32
    return %c0_i32, %c0_i32_0 : i32, i32
  }
  func.func @transform_1(%arg0: i32) -> (i32, i32) {
    %c0_i32 = arith.constant 0 : i32
    %c0_i32_0 = arith.constant 0 : i32
    %c0_i32_1 = arith.constant 0 : i32
    return %c0_i32, %c0_i32_0 : i32, i32
  }
  func.func @transform_2(%arg0: i32) -> (i32, i32) {
    %c0_i32 = arith.constant 0 : i32
    %c0_i32_0 = arith.constant 0 : i32
    return %arg0, %c0_i32 : i32, i32
  }
  func.func @transform_3(%arg0: i32) -> (i32, i32) {
    %c0_i32 = arith.constant 0 : i32
    %c0_i32_0 = arith.constant 0 : i32
    return %arg0, %c0_i32 : i32, i32
  }
  func.func @transform_4(%arg0: i32) -> (i32, i32, i32) {
    %c0_i32 = arith.constant 0 : i32
    %c0_i32_0 = arith.constant 0 : i32
    %c0_i32_1 = arith.constant 0 : i32
    return %c0_i32, %arg0, %c0_i32_0 : i32, i32, i32
  }
  func.func @transform_5(%arg0: i32) -> (i32, i32) {
    %c0_i32 = arith.constant 0 : i32
    %c0_i32_0 = arith.constant 0 : i32
    %c0_i32_1 = arith.constant 0 : i32
    return %c0_i32, %c0_i32_0 : i32, i32
  }
  func.func @transform_6(%arg0: i32) -> (i32, i32) {
    %c0_i32 = arith.constant 0 : i32
    %c0_i32_0 = arith.constant 0 : i32
    %c0_i32_1 = arith.constant 0 : i32
    return %c0_i32, %c0_i32_0 : i32, i32
  }
  func.func @transform_7(%arg0: i32) -> (i32, i32) {
    %c0_i32 = arith.constant 0 : i32
    %c0_i32_0 = arith.constant 0 : i32
    %c0_i32_1 = arith.constant 0 : i32
    return %c0_i32, %c0_i32_0 : i32, i32
  }
  func.func @transform_8(%arg0: i32) -> (i32, i32) {
    %c0_i32 = arith.constant 0 : i32
    %c0_i32_0 = arith.constant 0 : i32
    return %arg0, %c0_i32 : i32, i32
  }
}

module attributes {stable_mosaic.version = 11 : i64} {
  func.func @_gatv2_kernel(%arg0: i32, %arg1: memref<128x16xf32, #tpu.memory_space<vmem>>, %arg2: memref<16x128xf32, #tpu.memory_space<vmem>>, %arg3: memref<16x16xf32, #tpu.memory_space<vmem>>, %arg4: memref<16x128xbf16, #tpu.memory_space<vmem>>, %arg5: memref<3x16x128xbf16, #tpu.memory_space<vmem>>, %arg6: memref<1x128xf32, #tpu.memory_space<vmem>>, %arg7: memref<3x16xf32, #tpu.memory_space<smem>>, %arg8: memref<2x16xf32, #tpu.memory_space<smem>>, %arg9: memref<16x128xf32, #tpu.memory_space<vmem>>) attributes {dimension_semantics = [#tpu.dimension_semantics<parallel>], iteration_bounds = array<i64: 1>, scalar_prefetch = 0 : i64, scratch_operands = 0 : i64, tpu.core_type = #tpu.core_type<tc>, window_params = [{pipeline_mode = #tpu.pipeline_mode<synchronous>, transform_indices = @transform_0, window_bounds = array<i64: 128, 16>}, {pipeline_mode = #tpu.pipeline_mode<synchronous>, transform_indices = @transform_1, window_bounds = array<i64: 16, 128>}, {transform_indices = @transform_2, window_bounds = array<i64: 16, 16>}, {transform_indices = @transform_3, window_bounds = array<i64: 16, 128>}, {transform_indices = @transform_4, window_bounds = array<i64: 3, 16, 128>}, {pipeline_mode = #tpu.pipeline_mode<synchronous>, transform_indices = @transform_5, window_bounds = array<i64: 1, 128>}, {transform_indices = @transform_6, window_bounds = array<i64: 3, 16>}, {transform_indices = @transform_7, window_bounds = array<i64: 2, 16>}, {transform_indices = @transform_8, window_bounds = array<i64: 16, 128>}]} {
    %c0 = arith.constant 0 : index
    %c0_0 = arith.constant 0 : index
    %0 = vector.load %arg1[%c0, %c0_0] : memref<128x16xf32, #tpu.memory_space<vmem>>, vector<128x16xf32>
    %c0_1 = arith.constant 0 : index
    %c0_2 = arith.constant 0 : index
    %1 = vector.load %arg2[%c0_1, %c0_2] : memref<16x128xf32, #tpu.memory_space<vmem>>, vector<16x128xf32>
    %c0_3 = arith.constant 0 : index
    %c0_4 = arith.constant 0 : index
    %2 = vector.load %arg3[%c0_3, %c0_4] : memref<16x16xf32, #tpu.memory_space<vmem>>, vector<16x16xf32>
    %c0_5 = arith.constant 0 : index
    %c0_6 = arith.constant 0 : index
    %3 = vector.load %arg4[%c0_5, %c0_6] : memref<16x128xbf16, #tpu.memory_space<vmem>>, vector<16x128xbf16>
    %4 = arith.extf %3 : vector<16x128xbf16> to vector<16x128xf32>
    %c0_7 = arith.constant 0 : index
    %c0_8 = arith.constant 0 : index
    %c0_9 = arith.constant 0 : index
    %5 = vector.load %arg5[%c0_7, %c0_8, %c0_9] : memref<3x16x128xbf16, #tpu.memory_space<vmem>>, vector<1x16x128xbf16>
    %6 = vector.shape_cast %5 : vector<1x16x128xbf16> to vector<16x128xbf16>
    %7 = arith.extf %6 : vector<16x128xbf16> to vector<16x128xf32>
    %c1 = arith.constant 1 : index
    %c0_10 = arith.constant 0 : index
    %c0_11 = arith.constant 0 : index
    %8 = vector.load %arg5[%c1, %c0_10, %c0_11] : memref<3x16x128xbf16, #tpu.memory_space<vmem>>, vector<1x16x128xbf16>
    %9 = vector.shape_cast %8 : vector<1x16x128xbf16> to vector<16x128xbf16>
    %10 = arith.extf %9 : vector<16x128xbf16> to vector<16x128xf32>
    %c2 = arith.constant 2 : index
    %c0_12 = arith.constant 0 : index
    %c0_13 = arith.constant 0 : index
    %11 = vector.load %arg5[%c2, %c0_12, %c0_13] : memref<3x16x128xbf16, #tpu.memory_space<vmem>>, vector<1x16x128xbf16>
    %12 = vector.shape_cast %11 : vector<1x16x128xbf16> to vector<16x128xbf16>
    %13 = arith.extf %12 : vector<16x128xbf16> to vector<16x128xf32>
    %14 = tpu.iota {dimensions = array<i32: 1>} : vector<1x16xi32>
    %cst = arith.constant 0.000000e+00 : f32
    %15 = vector.broadcast %cst : f32 to vector<16x16xf32>
    %c0_14 = arith.constant 0 : index
    %c0_15 = arith.constant 0 : index
    %16 = memref.load %arg7[%c0_14, %c0_15] : memref<3x16xf32, #tpu.memory_space<smem>>
    %17 = vector.broadcast %16 : f32 to vector<16x128xf32>
    %18 = arith.mulf %7, %17 : vector<16x128xf32>
    %c1_16 = arith.constant 1 : index
    %c0_17 = arith.constant 0 : index
    %19 = memref.load %arg7[%c1_16, %c0_17] : memref<3x16xf32, #tpu.memory_space<smem>>
    %20 = vector.broadcast %19 : f32 to vector<16x128xf32>
    %21 = arith.mulf %10, %20 : vector<16x128xf32>
    %22 = arith.addf %18, %21 : vector<16x128xf32>
    %c2_18 = arith.constant 2 : index
    %c0_19 = arith.constant 0 : index
    %23 = memref.load %arg7[%c2_18, %c0_19] : memref<3x16xf32, #tpu.memory_space<smem>>
    %24 = vector.broadcast %23 : f32 to vector<16x128xf32>
    %25 = arith.mulf %13, %24 : vector<16x128xf32>
    %26 = arith.addf %22, %25 : vector<16x128xf32>
    %27 = vector.extract_strided_slice %2 {offsets = [0, 0], sizes = [16, 1], strides = [1, 1]} : vector<16x16xf32> to vector<16x1xf32>
    %28 = vector.extract_strided_slice %1 {offsets = [0, 0], sizes = [1, 128], strides = [1, 1]} : vector<16x128xf32> to vector<1x128xf32>
    %29 = vector.broadcast %27 : vector<16x1xf32> to vector<16x128xf32>
    %30 = vector.broadcast %28 : vector<1x128xf32> to vector<16x128xf32>
    %31 = arith.addf %29, %30 : vector<16x128xf32>
    %32 = arith.addf %31, %26 : vector<16x128xf32>
    %cst_20 = arith.constant 0.000000e+00 : f32
    %33 = vector.broadcast %cst_20 : f32 to vector<16x128xf32>
    %34 = arith.cmpf ogt, %32, %33 : vector<16x128xf32>
    %c0_21 = arith.constant 0 : index
    %c0_22 = arith.constant 0 : index
    %35 = memref.load %arg8[%c0_21, %c0_22] : memref<2x16xf32, #tpu.memory_space<smem>>
    %c1_23 = arith.constant 1 : index
    %c0_24 = arith.constant 0 : index
    %36 = memref.load %arg8[%c1_23, %c0_24] : memref<2x16xf32, #tpu.memory_space<smem>>
    %37 = vector.broadcast %35 : f32 to vector<16x128xf32>
    %38 = vector.broadcast %36 : f32 to vector<16x128xf32>
    %39 = arith.select %34, %37, %38 : vector<16x128xi1>, vector<16x128xf32>
    %40 = arith.mulf %39, %32 : vector<16x128xf32>
    %41 = arith.addf %4, %40 : vector<16x128xf32>
    %c0_25 = arith.constant 0 : index
    %c1_26 = arith.constant 1 : index
    %42 = memref.load %arg7[%c0_25, %c1_26] : memref<3x16xf32, #tpu.memory_space<smem>>
    %43 = vector.broadcast %42 : f32 to vector<16x128xf32>
    %44 = arith.mulf %7, %43 : vector<16x128xf32>
    %c1_27 = arith.constant 1 : index
    %c1_28 = arith.constant 1 : index
    %45 = memref.load %arg7[%c1_27, %c1_28] : memref<3x16xf32, #tpu.memory_space<smem>>
    %46 = vector.broadcast %45 : f32 to vector<16x128xf32>
    %47 = arith.mulf %10, %46 : vector<16x128xf32>
    %48 = arith.addf %44, %47 : vector<16x128xf32>
    %c2_29 = arith.constant 2 : index
    %c1_30 = arith.constant 1 : index
    %49 = memref.load %arg7[%c2_29, %c1_30] : memref<3x16xf32, #tpu.memory_space<smem>>
    %50 = vector.broadcast %49 : f32 to vector<16x128xf32>
    %51 = arith.mulf %13, %50 : vector<16x128xf32>
    %52 = arith.addf %48, %51 : vector<16x128xf32>
    %53 = vector.extract_strided_slice %2 {offsets = [0, 1], sizes = [16, 1], strides = [1, 1]} : vector<16x16xf32> to vector<16x1xf32>
    %54 = vector.extract_strided_slice %1 {offsets = [1, 0], sizes = [1, 128], strides = [1, 1]} : vector<16x128xf32> to vector<1x128xf32>
    %55 = vector.broadcast %53 : vector<16x1xf32> to vector<16x128xf32>
    %56 = vector.broadcast %54 : vector<1x128xf32> to vector<16x128xf32>
    %57 = arith.addf %55, %56 : vector<16x128xf32>
    %58 = arith.addf %57, %52 : vector<16x128xf32>
    %cst_31 = arith.constant 0.000000e+00 : f32
    %59 = vector.broadcast %cst_31 : f32 to vector<16x128xf32>
    %60 = arith.cmpf ogt, %58, %59 : vector<16x128xf32>
    %c0_32 = arith.constant 0 : index
    %c1_33 = arith.constant 1 : index
    %61 = memref.load %arg8[%c0_32, %c1_33] : memref<2x16xf32, #tpu.memory_space<smem>>
    %c1_34 = arith.constant 1 : index
    %c1_35 = arith.constant 1 : index
    %62 = memref.load %arg8[%c1_34, %c1_35] : memref<2x16xf32, #tpu.memory_space<smem>>
    %63 = vector.broadcast %61 : f32 to vector<16x128xf32>
    %64 = vector.broadcast %62 : f32 to vector<16x128xf32>
    %65 = arith.select %60, %63, %64 : vector<16x128xi1>, vector<16x128xf32>
    %66 = arith.mulf %65, %58 : vector<16x128xf32>
    %67 = arith.addf %41, %66 : vector<16x128xf32>
    %c0_36 = arith.constant 0 : index
    %c2_37 = arith.constant 2 : index
    %68 = memref.load %arg7[%c0_36, %c2_37] : memref<3x16xf32, #tpu.memory_space<smem>>
    %69 = vector.broadcast %68 : f32 to vector<16x128xf32>
    %70 = arith.mulf %7, %69 : vector<16x128xf32>
    %c1_38 = arith.constant 1 : index
    %c2_39 = arith.constant 2 : index
    %71 = memref.load %arg7[%c1_38, %c2_39] : memref<3x16xf32, #tpu.memory_space<smem>>
    %72 = vector.broadcast %71 : f32 to vector<16x128xf32>
    %73 = arith.mulf %10, %72 : vector<16x128xf32>
    %74 = arith.addf %70, %73 : vector<16x128xf32>
    %c2_40 = arith.constant 2 : index
    %c2_41 = arith.constant 2 : index
    %75 = memref.load %arg7[%c2_40, %c2_41] : memref<3x16xf32, #tpu.memory_space<smem>>
    %76 = vector.broadcast %75 : f32 to vector<16x128xf32>
    %77 = arith.mulf %13, %76 : vector<16x128xf32>
    %78 = arith.addf %74, %77 : vector<16x128xf32>
    %79 = vector.extract_strided_slice %2 {offsets = [0, 2], sizes = [16, 1], strides = [1, 1]} : vector<16x16xf32> to vector<16x1xf32>
    %80 = vector.extract_strided_slice %1 {offsets = [2, 0], sizes = [1, 128], strides = [1, 1]} : vector<16x128xf32> to vector<1x128xf32>
    %81 = vector.broadcast %79 : vector<16x1xf32> to vector<16x128xf32>
    %82 = vector.broadcast %80 : vector<1x128xf32> to vector<16x128xf32>
    %83 = arith.addf %81, %82 : vector<16x128xf32>
    %84 = arith.addf %83, %78 : vector<16x128xf32>
    %cst_42 = arith.constant 0.000000e+00 : f32
    %85 = vector.broadcast %cst_42 : f32 to vector<16x128xf32>
    %86 = arith.cmpf ogt, %84, %85 : vector<16x128xf32>
    %c0_43 = arith.constant 0 : index
    %c2_44 = arith.constant 2 : index
    %87 = memref.load %arg8[%c0_43, %c2_44] : memref<2x16xf32, #tpu.memory_space<smem>>
    %c1_45 = arith.constant 1 : index
    %c2_46 = arith.constant 2 : index
    %88 = memref.load %arg8[%c1_45, %c2_46] : memref<2x16xf32, #tpu.memory_space<smem>>
    %89 = vector.broadcast %87 : f32 to vector<16x128xf32>
    %90 = vector.broadcast %88 : f32 to vector<16x128xf32>
    %91 = arith.select %86, %89, %90 : vector<16x128xi1>, vector<16x128xf32>
    %92 = arith.mulf %91, %84 : vector<16x128xf32>
    %93 = arith.addf %67, %92 : vector<16x128xf32>
    %c0_47 = arith.constant 0 : index
    %c3 = arith.constant 3 : index
    %94 = memref.load %arg7[%c0_47, %c3] : memref<3x16xf32, #tpu.memory_space<smem>>
    %95 = vector.broadcast %94 : f32 to vector<16x128xf32>
    %96 = arith.mulf %7, %95 : vector<16x128xf32>
    %c1_48 = arith.constant 1 : index
    %c3_49 = arith.constant 3 : index
    %97 = memref.load %arg7[%c1_48, %c3_49] : memref<3x16xf32, #tpu.memory_space<smem>>
    %98 = vector.broadcast %97 : f32 to vector<16x128xf32>
    %99 = arith.mulf %10, %98 : vector<16x128xf32>
    %100 = arith.addf %96, %99 : vector<16x128xf32>
    %c2_50 = arith.constant 2 : index
    %c3_51 = arith.constant 3 : index
    %101 = memref.load %arg7[%c2_50, %c3_51] : memref<3x16xf32, #tpu.memory_space<smem>>
    %102 = vector.broadcast %101 : f32 to vector<16x128xf32>
    %103 = arith.mulf %13, %102 : vector<16x128xf32>
    %104 = arith.addf %100, %103 : vector<16x128xf32>
    %105 = vector.extract_strided_slice %2 {offsets = [0, 3], sizes = [16, 1], strides = [1, 1]} : vector<16x16xf32> to vector<16x1xf32>
    %106 = vector.extract_strided_slice %1 {offsets = [3, 0], sizes = [1, 128], strides = [1, 1]} : vector<16x128xf32> to vector<1x128xf32>
    %107 = vector.broadcast %105 : vector<16x1xf32> to vector<16x128xf32>
    %108 = vector.broadcast %106 : vector<1x128xf32> to vector<16x128xf32>
    %109 = arith.addf %107, %108 : vector<16x128xf32>
    %110 = arith.addf %109, %104 : vector<16x128xf32>
    %cst_52 = arith.constant 0.000000e+00 : f32
    %111 = vector.broadcast %cst_52 : f32 to vector<16x128xf32>
    %112 = arith.cmpf ogt, %110, %111 : vector<16x128xf32>
    %c0_53 = arith.constant 0 : index
    %c3_54 = arith.constant 3 : index
    %113 = memref.load %arg8[%c0_53, %c3_54] : memref<2x16xf32, #tpu.memory_space<smem>>
    %c1_55 = arith.constant 1 : index
    %c3_56 = arith.constant 3 : index
    %114 = memref.load %arg8[%c1_55, %c3_56] : memref<2x16xf32, #tpu.memory_space<smem>>
    %115 = vector.broadcast %113 : f32 to vector<16x128xf32>
    %116 = vector.broadcast %114 : f32 to vector<16x128xf32>
    %117 = arith.select %112, %115, %116 : vector<16x128xi1>, vector<16x128xf32>
    %118 = arith.mulf %117, %110 : vector<16x128xf32>
    %119 = arith.addf %93, %118 : vector<16x128xf32>
    %c0_57 = arith.constant 0 : index
    %c4 = arith.constant 4 : index
    %120 = memref.load %arg7[%c0_57, %c4] : memref<3x16xf32, #tpu.memory_space<smem>>
    %121 = vector.broadcast %120 : f32 to vector<16x128xf32>
    %122 = arith.mulf %7, %121 : vector<16x128xf32>
    %c1_58 = arith.constant 1 : index
    %c4_59 = arith.constant 4 : index
    %123 = memref.load %arg7[%c1_58, %c4_59] : memref<3x16xf32, #tpu.memory_space<smem>>
    %124 = vector.broadcast %123 : f32 to vector<16x128xf32>
    %125 = arith.mulf %10, %124 : vector<16x128xf32>
    %126 = arith.addf %122, %125 : vector<16x128xf32>
    %c2_60 = arith.constant 2 : index
    %c4_61 = arith.constant 4 : index
    %127 = memref.load %arg7[%c2_60, %c4_61] : memref<3x16xf32, #tpu.memory_space<smem>>
    %128 = vector.broadcast %127 : f32 to vector<16x128xf32>
    %129 = arith.mulf %13, %128 : vector<16x128xf32>
    %130 = arith.addf %126, %129 : vector<16x128xf32>
    %131 = vector.extract_strided_slice %2 {offsets = [0, 4], sizes = [16, 1], strides = [1, 1]} : vector<16x16xf32> to vector<16x1xf32>
    %132 = vector.extract_strided_slice %1 {offsets = [4, 0], sizes = [1, 128], strides = [1, 1]} : vector<16x128xf32> to vector<1x128xf32>
    %133 = vector.broadcast %131 : vector<16x1xf32> to vector<16x128xf32>
    %134 = vector.broadcast %132 : vector<1x128xf32> to vector<16x128xf32>
    %135 = arith.addf %133, %134 : vector<16x128xf32>
    %136 = arith.addf %135, %130 : vector<16x128xf32>
    %cst_62 = arith.constant 0.000000e+00 : f32
    %137 = vector.broadcast %cst_62 : f32 to vector<16x128xf32>
    %138 = arith.cmpf ogt, %136, %137 : vector<16x128xf32>
    %c0_63 = arith.constant 0 : index
    %c4_64 = arith.constant 4 : index
    %139 = memref.load %arg8[%c0_63, %c4_64] : memref<2x16xf32, #tpu.memory_space<smem>>
    %c1_65 = arith.constant 1 : index
    %c4_66 = arith.constant 4 : index
    %140 = memref.load %arg8[%c1_65, %c4_66] : memref<2x16xf32, #tpu.memory_space<smem>>
    %141 = vector.broadcast %139 : f32 to vector<16x128xf32>
    %142 = vector.broadcast %140 : f32 to vector<16x128xf32>
    %143 = arith.select %138, %141, %142 : vector<16x128xi1>, vector<16x128xf32>
    %144 = arith.mulf %143, %136 : vector<16x128xf32>
    %145 = arith.addf %119, %144 : vector<16x128xf32>
    %c0_67 = arith.constant 0 : index
    %c5 = arith.constant 5 : index
    %146 = memref.load %arg7[%c0_67, %c5] : memref<3x16xf32, #tpu.memory_space<smem>>
    %147 = vector.broadcast %146 : f32 to vector<16x128xf32>
    %148 = arith.mulf %7, %147 : vector<16x128xf32>
    %c1_68 = arith.constant 1 : index
    %c5_69 = arith.constant 5 : index
    %149 = memref.load %arg7[%c1_68, %c5_69] : memref<3x16xf32, #tpu.memory_space<smem>>
    %150 = vector.broadcast %149 : f32 to vector<16x128xf32>
    %151 = arith.mulf %10, %150 : vector<16x128xf32>
    %152 = arith.addf %148, %151 : vector<16x128xf32>
    %c2_70 = arith.constant 2 : index
    %c5_71 = arith.constant 5 : index
    %153 = memref.load %arg7[%c2_70, %c5_71] : memref<3x16xf32, #tpu.memory_space<smem>>
    %154 = vector.broadcast %153 : f32 to vector<16x128xf32>
    %155 = arith.mulf %13, %154 : vector<16x128xf32>
    %156 = arith.addf %152, %155 : vector<16x128xf32>
    %157 = vector.extract_strided_slice %2 {offsets = [0, 5], sizes = [16, 1], strides = [1, 1]} : vector<16x16xf32> to vector<16x1xf32>
    %158 = vector.extract_strided_slice %1 {offsets = [5, 0], sizes = [1, 128], strides = [1, 1]} : vector<16x128xf32> to vector<1x128xf32>
    %159 = vector.broadcast %157 : vector<16x1xf32> to vector<16x128xf32>
    %160 = vector.broadcast %158 : vector<1x128xf32> to vector<16x128xf32>
    %161 = arith.addf %159, %160 : vector<16x128xf32>
    %162 = arith.addf %161, %156 : vector<16x128xf32>
    %cst_72 = arith.constant 0.000000e+00 : f32
    %163 = vector.broadcast %cst_72 : f32 to vector<16x128xf32>
    %164 = arith.cmpf ogt, %162, %163 : vector<16x128xf32>
    %c0_73 = arith.constant 0 : index
    %c5_74 = arith.constant 5 : index
    %165 = memref.load %arg8[%c0_73, %c5_74] : memref<2x16xf32, #tpu.memory_space<smem>>
    %c1_75 = arith.constant 1 : index
    %c5_76 = arith.constant 5 : index
    %166 = memref.load %arg8[%c1_75, %c5_76] : memref<2x16xf32, #tpu.memory_space<smem>>
    %167 = vector.broadcast %165 : f32 to vector<16x128xf32>
    %168 = vector.broadcast %166 : f32 to vector<16x128xf32>
    %169 = arith.select %164, %167, %168 : vector<16x128xi1>, vector<16x128xf32>
    %170 = arith.mulf %169, %162 : vector<16x128xf32>
    %171 = arith.addf %145, %170 : vector<16x128xf32>
    %c0_77 = arith.constant 0 : index
    %c6 = arith.constant 6 : index
    %172 = memref.load %arg7[%c0_77, %c6] : memref<3x16xf32, #tpu.memory_space<smem>>
    %173 = vector.broadcast %172 : f32 to vector<16x128xf32>
    %174 = arith.mulf %7, %173 : vector<16x128xf32>
    %c1_78 = arith.constant 1 : index
    %c6_79 = arith.constant 6 : index
    %175 = memref.load %arg7[%c1_78, %c6_79] : memref<3x16xf32, #tpu.memory_space<smem>>
    %176 = vector.broadcast %175 : f32 to vector<16x128xf32>
    %177 = arith.mulf %10, %176 : vector<16x128xf32>
    %178 = arith.addf %174, %177 : vector<16x128xf32>
    %c2_80 = arith.constant 2 : index
    %c6_81 = arith.constant 6 : index
    %179 = memref.load %arg7[%c2_80, %c6_81] : memref<3x16xf32, #tpu.memory_space<smem>>
    %180 = vector.broadcast %179 : f32 to vector<16x128xf32>
    %181 = arith.mulf %13, %180 : vector<16x128xf32>
    %182 = arith.addf %178, %181 : vector<16x128xf32>
    %183 = vector.extract_strided_slice %2 {offsets = [0, 6], sizes = [16, 1], strides = [1, 1]} : vector<16x16xf32> to vector<16x1xf32>
    %184 = vector.extract_strided_slice %1 {offsets = [6, 0], sizes = [1, 128], strides = [1, 1]} : vector<16x128xf32> to vector<1x128xf32>
    %185 = vector.broadcast %183 : vector<16x1xf32> to vector<16x128xf32>
    %186 = vector.broadcast %184 : vector<1x128xf32> to vector<16x128xf32>
    %187 = arith.addf %185, %186 : vector<16x128xf32>
    %188 = arith.addf %187, %182 : vector<16x128xf32>
    %cst_82 = arith.constant 0.000000e+00 : f32
    %189 = vector.broadcast %cst_82 : f32 to vector<16x128xf32>
    %190 = arith.cmpf ogt, %188, %189 : vector<16x128xf32>
    %c0_83 = arith.constant 0 : index
    %c6_84 = arith.constant 6 : index
    %191 = memref.load %arg8[%c0_83, %c6_84] : memref<2x16xf32, #tpu.memory_space<smem>>
    %c1_85 = arith.constant 1 : index
    %c6_86 = arith.constant 6 : index
    %192 = memref.load %arg8[%c1_85, %c6_86] : memref<2x16xf32, #tpu.memory_space<smem>>
    %193 = vector.broadcast %191 : f32 to vector<16x128xf32>
    %194 = vector.broadcast %192 : f32 to vector<16x128xf32>
    %195 = arith.select %190, %193, %194 : vector<16x128xi1>, vector<16x128xf32>
    %196 = arith.mulf %195, %188 : vector<16x128xf32>
    %197 = arith.addf %171, %196 : vector<16x128xf32>
    %c0_87 = arith.constant 0 : index
    %c7 = arith.constant 7 : index
    %198 = memref.load %arg7[%c0_87, %c7] : memref<3x16xf32, #tpu.memory_space<smem>>
    %199 = vector.broadcast %198 : f32 to vector<16x128xf32>
    %200 = arith.mulf %7, %199 : vector<16x128xf32>
    %c1_88 = arith.constant 1 : index
    %c7_89 = arith.constant 7 : index
    %201 = memref.load %arg7[%c1_88, %c7_89] : memref<3x16xf32, #tpu.memory_space<smem>>
    %202 = vector.broadcast %201 : f32 to vector<16x128xf32>
    %203 = arith.mulf %10, %202 : vector<16x128xf32>
    %204 = arith.addf %200, %203 : vector<16x128xf32>
    %c2_90 = arith.constant 2 : index
    %c7_91 = arith.constant 7 : index
    %205 = memref.load %arg7[%c2_90, %c7_91] : memref<3x16xf32, #tpu.memory_space<smem>>
    %206 = vector.broadcast %205 : f32 to vector<16x128xf32>
    %207 = arith.mulf %13, %206 : vector<16x128xf32>
    %208 = arith.addf %204, %207 : vector<16x128xf32>
    %209 = vector.extract_strided_slice %2 {offsets = [0, 7], sizes = [16, 1], strides = [1, 1]} : vector<16x16xf32> to vector<16x1xf32>
    %210 = vector.extract_strided_slice %1 {offsets = [7, 0], sizes = [1, 128], strides = [1, 1]} : vector<16x128xf32> to vector<1x128xf32>
    %211 = vector.broadcast %209 : vector<16x1xf32> to vector<16x128xf32>
    %212 = vector.broadcast %210 : vector<1x128xf32> to vector<16x128xf32>
    %213 = arith.addf %211, %212 : vector<16x128xf32>
    %214 = arith.addf %213, %208 : vector<16x128xf32>
    %cst_92 = arith.constant 0.000000e+00 : f32
    %215 = vector.broadcast %cst_92 : f32 to vector<16x128xf32>
    %216 = arith.cmpf ogt, %214, %215 : vector<16x128xf32>
    %c0_93 = arith.constant 0 : index
    %c7_94 = arith.constant 7 : index
    %217 = memref.load %arg8[%c0_93, %c7_94] : memref<2x16xf32, #tpu.memory_space<smem>>
    %c1_95 = arith.constant 1 : index
    %c7_96 = arith.constant 7 : index
    %218 = memref.load %arg8[%c1_95, %c7_96] : memref<2x16xf32, #tpu.memory_space<smem>>
    %219 = vector.broadcast %217 : f32 to vector<16x128xf32>
    %220 = vector.broadcast %218 : f32 to vector<16x128xf32>
    %221 = arith.select %216, %219, %220 : vector<16x128xi1>, vector<16x128xf32>
    %222 = arith.mulf %221, %214 : vector<16x128xf32>
    %223 = arith.addf %197, %222 : vector<16x128xf32>
    %cst_97 = arith.constant dense<0xFF800000> : vector<16xf32>
    %224 = vector.multi_reduction <maximumf>, %223, %cst_97 [1] : vector<16x128xf32> to vector<16xf32>
    %225 = vector.shape_cast %224 : vector<16xf32> to vector<16x1xf32>
    %226 = vector.broadcast %225 : vector<16x1xf32> to vector<16x128xf32>
    %227 = arith.subf %223, %226 : vector<16x128xf32>
    %228 = math.exp %227 : vector<16x128xf32>
    %cst_98 = arith.constant dense<0.000000e+00> : vector<16xf32>
    %229 = vector.multi_reduction <add>, %228, %cst_98 [1] : vector<16x128xf32> to vector<16xf32>
    %230 = vector.shape_cast %229 : vector<16xf32> to vector<16x1xf32>
    %231 = tpu.reciprocal %230 {approx = true} : vector<16x1xf32> -> vector<16x1xf32>
    %232 = vector.broadcast %231 : vector<16x1xf32> to vector<16x128xf32>
    %233 = arith.mulf %228, %232 : vector<16x128xf32>
    %cst_99 = arith.constant dense<0.000000e+00> : vector<16x16xf32>
    %234 = tpu.matmul %233, %0, %cst_99 {dimension_numbers = #tpu.dot_dimension_numbers<[1], [0], [0], [1], [0, 0, 1, 1], [], []>} : vector<16x128xf32>, vector<128x16xf32>, vector<16x16xf32> -> vector<16x16xf32>
    %c0_i32 = arith.constant 0 : i32
    %235 = vector.broadcast %c0_i32 : i32 to vector<1x16xi32>
    %236 = arith.cmpi sge, %14, %235 : vector<1x16xi32>
    %c8_i32 = arith.constant 8 : i32
    %237 = vector.broadcast %c8_i32 : i32 to vector<1x16xi32>
    %238 = arith.cmpi slt, %14, %237 : vector<1x16xi32>
    %239 = arith.andi %236, %238 : vector<1x16xi1>
    %cst_100 = arith.constant 0.000000e+00 : f32
    %240 = vector.shape_cast %239 : vector<1x16xi1> to vector<1x16xi1>
    %241 = vector.broadcast %240 : vector<1x16xi1> to vector<16x16xi1>
    %242 = vector.broadcast %cst_100 : f32 to vector<16x16xf32>
    %243 = arith.select %241, %234, %242 : vector<16x16xi1>, vector<16x16xf32>
    %244 = arith.addf %15, %243 : vector<16x16xf32>
    %c0_101 = arith.constant 0 : index
    %c8 = arith.constant 8 : index
    %245 = memref.load %arg7[%c0_101, %c8] : memref<3x16xf32, #tpu.memory_space<smem>>
    %246 = vector.broadcast %245 : f32 to vector<16x128xf32>
    %247 = arith.mulf %7, %246 : vector<16x128xf32>
    %c1_102 = arith.constant 1 : index
    %c8_103 = arith.constant 8 : index
    %248 = memref.load %arg7[%c1_102, %c8_103] : memref<3x16xf32, #tpu.memory_space<smem>>
    %249 = vector.broadcast %248 : f32 to vector<16x128xf32>
    %250 = arith.mulf %10, %249 : vector<16x128xf32>
    %251 = arith.addf %247, %250 : vector<16x128xf32>
    %c2_104 = arith.constant 2 : index
    %c8_105 = arith.constant 8 : index
    %252 = memref.load %arg7[%c2_104, %c8_105] : memref<3x16xf32, #tpu.memory_space<smem>>
    %253 = vector.broadcast %252 : f32 to vector<16x128xf32>
    %254 = arith.mulf %13, %253 : vector<16x128xf32>
    %255 = arith.addf %251, %254 : vector<16x128xf32>
    %256 = vector.extract_strided_slice %2 {offsets = [0, 8], sizes = [16, 1], strides = [1, 1]} : vector<16x16xf32> to vector<16x1xf32>
    %257 = vector.extract_strided_slice %1 {offsets = [8, 0], sizes = [1, 128], strides = [1, 1]} : vector<16x128xf32> to vector<1x128xf32>
    %258 = vector.broadcast %256 : vector<16x1xf32> to vector<16x128xf32>
    %259 = vector.broadcast %257 : vector<1x128xf32> to vector<16x128xf32>
    %260 = arith.addf %258, %259 : vector<16x128xf32>
    %261 = arith.addf %260, %255 : vector<16x128xf32>
    %cst_106 = arith.constant 0.000000e+00 : f32
    %262 = vector.broadcast %cst_106 : f32 to vector<16x128xf32>
    %263 = arith.cmpf ogt, %261, %262 : vector<16x128xf32>
    %c0_107 = arith.constant 0 : index
    %c8_108 = arith.constant 8 : index
    %264 = memref.load %arg8[%c0_107, %c8_108] : memref<2x16xf32, #tpu.memory_space<smem>>
    %c1_109 = arith.constant 1 : index
    %c8_110 = arith.constant 8 : index
    %265 = memref.load %arg8[%c1_109, %c8_110] : memref<2x16xf32, #tpu.memory_space<smem>>
    %266 = vector.broadcast %264 : f32 to vector<16x128xf32>
    %267 = vector.broadcast %265 : f32 to vector<16x128xf32>
    %268 = arith.select %263, %266, %267 : vector<16x128xi1>, vector<16x128xf32>
    %269 = arith.mulf %268, %261 : vector<16x128xf32>
    %270 = arith.addf %4, %269 : vector<16x128xf32>
    %c0_111 = arith.constant 0 : index
    %c9 = arith.constant 9 : index
    %271 = memref.load %arg7[%c0_111, %c9] : memref<3x16xf32, #tpu.memory_space<smem>>
    %272 = vector.broadcast %271 : f32 to vector<16x128xf32>
    %273 = arith.mulf %7, %272 : vector<16x128xf32>
    %c1_112 = arith.constant 1 : index
    %c9_113 = arith.constant 9 : index
    %274 = memref.load %arg7[%c1_112, %c9_113] : memref<3x16xf32, #tpu.memory_space<smem>>
    %275 = vector.broadcast %274 : f32 to vector<16x128xf32>
    %276 = arith.mulf %10, %275 : vector<16x128xf32>
    %277 = arith.addf %273, %276 : vector<16x128xf32>
    %c2_114 = arith.constant 2 : index
    %c9_115 = arith.constant 9 : index
    %278 = memref.load %arg7[%c2_114, %c9_115] : memref<3x16xf32, #tpu.memory_space<smem>>
    %279 = vector.broadcast %278 : f32 to vector<16x128xf32>
    %280 = arith.mulf %13, %279 : vector<16x128xf32>
    %281 = arith.addf %277, %280 : vector<16x128xf32>
    %282 = vector.extract_strided_slice %2 {offsets = [0, 9], sizes = [16, 1], strides = [1, 1]} : vector<16x16xf32> to vector<16x1xf32>
    %283 = vector.extract_strided_slice %1 {offsets = [9, 0], sizes = [1, 128], strides = [1, 1]} : vector<16x128xf32> to vector<1x128xf32>
    %284 = vector.broadcast %282 : vector<16x1xf32> to vector<16x128xf32>
    %285 = vector.broadcast %283 : vector<1x128xf32> to vector<16x128xf32>
    %286 = arith.addf %284, %285 : vector<16x128xf32>
    %287 = arith.addf %286, %281 : vector<16x128xf32>
    %cst_116 = arith.constant 0.000000e+00 : f32
    %288 = vector.broadcast %cst_116 : f32 to vector<16x128xf32>
    %289 = arith.cmpf ogt, %287, %288 : vector<16x128xf32>
    %c0_117 = arith.constant 0 : index
    %c9_118 = arith.constant 9 : index
    %290 = memref.load %arg8[%c0_117, %c9_118] : memref<2x16xf32, #tpu.memory_space<smem>>
    %c1_119 = arith.constant 1 : index
    %c9_120 = arith.constant 9 : index
    %291 = memref.load %arg8[%c1_119, %c9_120] : memref<2x16xf32, #tpu.memory_space<smem>>
    %292 = vector.broadcast %290 : f32 to vector<16x128xf32>
    %293 = vector.broadcast %291 : f32 to vector<16x128xf32>
    %294 = arith.select %289, %292, %293 : vector<16x128xi1>, vector<16x128xf32>
    %295 = arith.mulf %294, %287 : vector<16x128xf32>
    %296 = arith.addf %270, %295 : vector<16x128xf32>
    %c0_121 = arith.constant 0 : index
    %c10 = arith.constant 10 : index
    %297 = memref.load %arg7[%c0_121, %c10] : memref<3x16xf32, #tpu.memory_space<smem>>
    %298 = vector.broadcast %297 : f32 to vector<16x128xf32>
    %299 = arith.mulf %7, %298 : vector<16x128xf32>
    %c1_122 = arith.constant 1 : index
    %c10_123 = arith.constant 10 : index
    %300 = memref.load %arg7[%c1_122, %c10_123] : memref<3x16xf32, #tpu.memory_space<smem>>
    %301 = vector.broadcast %300 : f32 to vector<16x128xf32>
    %302 = arith.mulf %10, %301 : vector<16x128xf32>
    %303 = arith.addf %299, %302 : vector<16x128xf32>
    %c2_124 = arith.constant 2 : index
    %c10_125 = arith.constant 10 : index
    %304 = memref.load %arg7[%c2_124, %c10_125] : memref<3x16xf32, #tpu.memory_space<smem>>
    %305 = vector.broadcast %304 : f32 to vector<16x128xf32>
    %306 = arith.mulf %13, %305 : vector<16x128xf32>
    %307 = arith.addf %303, %306 : vector<16x128xf32>
    %308 = vector.extract_strided_slice %2 {offsets = [0, 10], sizes = [16, 1], strides = [1, 1]} : vector<16x16xf32> to vector<16x1xf32>
    %309 = vector.extract_strided_slice %1 {offsets = [10, 0], sizes = [1, 128], strides = [1, 1]} : vector<16x128xf32> to vector<1x128xf32>
    %310 = vector.broadcast %308 : vector<16x1xf32> to vector<16x128xf32>
    %311 = vector.broadcast %309 : vector<1x128xf32> to vector<16x128xf32>
    %312 = arith.addf %310, %311 : vector<16x128xf32>
    %313 = arith.addf %312, %307 : vector<16x128xf32>
    %cst_126 = arith.constant 0.000000e+00 : f32
    %314 = vector.broadcast %cst_126 : f32 to vector<16x128xf32>
    %315 = arith.cmpf ogt, %313, %314 : vector<16x128xf32>
    %c0_127 = arith.constant 0 : index
    %c10_128 = arith.constant 10 : index
    %316 = memref.load %arg8[%c0_127, %c10_128] : memref<2x16xf32, #tpu.memory_space<smem>>
    %c1_129 = arith.constant 1 : index
    %c10_130 = arith.constant 10 : index
    %317 = memref.load %arg8[%c1_129, %c10_130] : memref<2x16xf32, #tpu.memory_space<smem>>
    %318 = vector.broadcast %316 : f32 to vector<16x128xf32>
    %319 = vector.broadcast %317 : f32 to vector<16x128xf32>
    %320 = arith.select %315, %318, %319 : vector<16x128xi1>, vector<16x128xf32>
    %321 = arith.mulf %320, %313 : vector<16x128xf32>
    %322 = arith.addf %296, %321 : vector<16x128xf32>
    %c0_131 = arith.constant 0 : index
    %c11 = arith.constant 11 : index
    %323 = memref.load %arg7[%c0_131, %c11] : memref<3x16xf32, #tpu.memory_space<smem>>
    %324 = vector.broadcast %323 : f32 to vector<16x128xf32>
    %325 = arith.mulf %7, %324 : vector<16x128xf32>
    %c1_132 = arith.constant 1 : index
    %c11_133 = arith.constant 11 : index
    %326 = memref.load %arg7[%c1_132, %c11_133] : memref<3x16xf32, #tpu.memory_space<smem>>
    %327 = vector.broadcast %326 : f32 to vector<16x128xf32>
    %328 = arith.mulf %10, %327 : vector<16x128xf32>
    %329 = arith.addf %325, %328 : vector<16x128xf32>
    %c2_134 = arith.constant 2 : index
    %c11_135 = arith.constant 11 : index
    %330 = memref.load %arg7[%c2_134, %c11_135] : memref<3x16xf32, #tpu.memory_space<smem>>
    %331 = vector.broadcast %330 : f32 to vector<16x128xf32>
    %332 = arith.mulf %13, %331 : vector<16x128xf32>
    %333 = arith.addf %329, %332 : vector<16x128xf32>
    %334 = vector.extract_strided_slice %2 {offsets = [0, 11], sizes = [16, 1], strides = [1, 1]} : vector<16x16xf32> to vector<16x1xf32>
    %335 = vector.extract_strided_slice %1 {offsets = [11, 0], sizes = [1, 128], strides = [1, 1]} : vector<16x128xf32> to vector<1x128xf32>
    %336 = vector.broadcast %334 : vector<16x1xf32> to vector<16x128xf32>
    %337 = vector.broadcast %335 : vector<1x128xf32> to vector<16x128xf32>
    %338 = arith.addf %336, %337 : vector<16x128xf32>
    %339 = arith.addf %338, %333 : vector<16x128xf32>
    %cst_136 = arith.constant 0.000000e+00 : f32
    %340 = vector.broadcast %cst_136 : f32 to vector<16x128xf32>
    %341 = arith.cmpf ogt, %339, %340 : vector<16x128xf32>
    %c0_137 = arith.constant 0 : index
    %c11_138 = arith.constant 11 : index
    %342 = memref.load %arg8[%c0_137, %c11_138] : memref<2x16xf32, #tpu.memory_space<smem>>
    %c1_139 = arith.constant 1 : index
    %c11_140 = arith.constant 11 : index
    %343 = memref.load %arg8[%c1_139, %c11_140] : memref<2x16xf32, #tpu.memory_space<smem>>
    %344 = vector.broadcast %342 : f32 to vector<16x128xf32>
    %345 = vector.broadcast %343 : f32 to vector<16x128xf32>
    %346 = arith.select %341, %344, %345 : vector<16x128xi1>, vector<16x128xf32>
    %347 = arith.mulf %346, %339 : vector<16x128xf32>
    %348 = arith.addf %322, %347 : vector<16x128xf32>
    %c0_141 = arith.constant 0 : index
    %c12 = arith.constant 12 : index
    %349 = memref.load %arg7[%c0_141, %c12] : memref<3x16xf32, #tpu.memory_space<smem>>
    %350 = vector.broadcast %349 : f32 to vector<16x128xf32>
    %351 = arith.mulf %7, %350 : vector<16x128xf32>
    %c1_142 = arith.constant 1 : index
    %c12_143 = arith.constant 12 : index
    %352 = memref.load %arg7[%c1_142, %c12_143] : memref<3x16xf32, #tpu.memory_space<smem>>
    %353 = vector.broadcast %352 : f32 to vector<16x128xf32>
    %354 = arith.mulf %10, %353 : vector<16x128xf32>
    %355 = arith.addf %351, %354 : vector<16x128xf32>
    %c2_144 = arith.constant 2 : index
    %c12_145 = arith.constant 12 : index
    %356 = memref.load %arg7[%c2_144, %c12_145] : memref<3x16xf32, #tpu.memory_space<smem>>
    %357 = vector.broadcast %356 : f32 to vector<16x128xf32>
    %358 = arith.mulf %13, %357 : vector<16x128xf32>
    %359 = arith.addf %355, %358 : vector<16x128xf32>
    %360 = vector.extract_strided_slice %2 {offsets = [0, 12], sizes = [16, 1], strides = [1, 1]} : vector<16x16xf32> to vector<16x1xf32>
    %361 = vector.extract_strided_slice %1 {offsets = [12, 0], sizes = [1, 128], strides = [1, 1]} : vector<16x128xf32> to vector<1x128xf32>
    %362 = vector.broadcast %360 : vector<16x1xf32> to vector<16x128xf32>
    %363 = vector.broadcast %361 : vector<1x128xf32> to vector<16x128xf32>
    %364 = arith.addf %362, %363 : vector<16x128xf32>
    %365 = arith.addf %364, %359 : vector<16x128xf32>
    %cst_146 = arith.constant 0.000000e+00 : f32
    %366 = vector.broadcast %cst_146 : f32 to vector<16x128xf32>
    %367 = arith.cmpf ogt, %365, %366 : vector<16x128xf32>
    %c0_147 = arith.constant 0 : index
    %c12_148 = arith.constant 12 : index
    %368 = memref.load %arg8[%c0_147, %c12_148] : memref<2x16xf32, #tpu.memory_space<smem>>
    %c1_149 = arith.constant 1 : index
    %c12_150 = arith.constant 12 : index
    %369 = memref.load %arg8[%c1_149, %c12_150] : memref<2x16xf32, #tpu.memory_space<smem>>
    %370 = vector.broadcast %368 : f32 to vector<16x128xf32>
    %371 = vector.broadcast %369 : f32 to vector<16x128xf32>
    %372 = arith.select %367, %370, %371 : vector<16x128xi1>, vector<16x128xf32>
    %373 = arith.mulf %372, %365 : vector<16x128xf32>
    %374 = arith.addf %348, %373 : vector<16x128xf32>
    %c0_151 = arith.constant 0 : index
    %c13 = arith.constant 13 : index
    %375 = memref.load %arg7[%c0_151, %c13] : memref<3x16xf32, #tpu.memory_space<smem>>
    %376 = vector.broadcast %375 : f32 to vector<16x128xf32>
    %377 = arith.mulf %7, %376 : vector<16x128xf32>
    %c1_152 = arith.constant 1 : index
    %c13_153 = arith.constant 13 : index
    %378 = memref.load %arg7[%c1_152, %c13_153] : memref<3x16xf32, #tpu.memory_space<smem>>
    %379 = vector.broadcast %378 : f32 to vector<16x128xf32>
    %380 = arith.mulf %10, %379 : vector<16x128xf32>
    %381 = arith.addf %377, %380 : vector<16x128xf32>
    %c2_154 = arith.constant 2 : index
    %c13_155 = arith.constant 13 : index
    %382 = memref.load %arg7[%c2_154, %c13_155] : memref<3x16xf32, #tpu.memory_space<smem>>
    %383 = vector.broadcast %382 : f32 to vector<16x128xf32>
    %384 = arith.mulf %13, %383 : vector<16x128xf32>
    %385 = arith.addf %381, %384 : vector<16x128xf32>
    %386 = vector.extract_strided_slice %2 {offsets = [0, 13], sizes = [16, 1], strides = [1, 1]} : vector<16x16xf32> to vector<16x1xf32>
    %387 = vector.extract_strided_slice %1 {offsets = [13, 0], sizes = [1, 128], strides = [1, 1]} : vector<16x128xf32> to vector<1x128xf32>
    %388 = vector.broadcast %386 : vector<16x1xf32> to vector<16x128xf32>
    %389 = vector.broadcast %387 : vector<1x128xf32> to vector<16x128xf32>
    %390 = arith.addf %388, %389 : vector<16x128xf32>
    %391 = arith.addf %390, %385 : vector<16x128xf32>
    %cst_156 = arith.constant 0.000000e+00 : f32
    %392 = vector.broadcast %cst_156 : f32 to vector<16x128xf32>
    %393 = arith.cmpf ogt, %391, %392 : vector<16x128xf32>
    %c0_157 = arith.constant 0 : index
    %c13_158 = arith.constant 13 : index
    %394 = memref.load %arg8[%c0_157, %c13_158] : memref<2x16xf32, #tpu.memory_space<smem>>
    %c1_159 = arith.constant 1 : index
    %c13_160 = arith.constant 13 : index
    %395 = memref.load %arg8[%c1_159, %c13_160] : memref<2x16xf32, #tpu.memory_space<smem>>
    %396 = vector.broadcast %394 : f32 to vector<16x128xf32>
    %397 = vector.broadcast %395 : f32 to vector<16x128xf32>
    %398 = arith.select %393, %396, %397 : vector<16x128xi1>, vector<16x128xf32>
    %399 = arith.mulf %398, %391 : vector<16x128xf32>
    %400 = arith.addf %374, %399 : vector<16x128xf32>
    %c0_161 = arith.constant 0 : index
    %c14 = arith.constant 14 : index
    %401 = memref.load %arg7[%c0_161, %c14] : memref<3x16xf32, #tpu.memory_space<smem>>
    %402 = vector.broadcast %401 : f32 to vector<16x128xf32>
    %403 = arith.mulf %7, %402 : vector<16x128xf32>
    %c1_162 = arith.constant 1 : index
    %c14_163 = arith.constant 14 : index
    %404 = memref.load %arg7[%c1_162, %c14_163] : memref<3x16xf32, #tpu.memory_space<smem>>
    %405 = vector.broadcast %404 : f32 to vector<16x128xf32>
    %406 = arith.mulf %10, %405 : vector<16x128xf32>
    %407 = arith.addf %403, %406 : vector<16x128xf32>
    %c2_164 = arith.constant 2 : index
    %c14_165 = arith.constant 14 : index
    %408 = memref.load %arg7[%c2_164, %c14_165] : memref<3x16xf32, #tpu.memory_space<smem>>
    %409 = vector.broadcast %408 : f32 to vector<16x128xf32>
    %410 = arith.mulf %13, %409 : vector<16x128xf32>
    %411 = arith.addf %407, %410 : vector<16x128xf32>
    %412 = vector.extract_strided_slice %2 {offsets = [0, 14], sizes = [16, 1], strides = [1, 1]} : vector<16x16xf32> to vector<16x1xf32>
    %413 = vector.extract_strided_slice %1 {offsets = [14, 0], sizes = [1, 128], strides = [1, 1]} : vector<16x128xf32> to vector<1x128xf32>
    %414 = vector.broadcast %412 : vector<16x1xf32> to vector<16x128xf32>
    %415 = vector.broadcast %413 : vector<1x128xf32> to vector<16x128xf32>
    %416 = arith.addf %414, %415 : vector<16x128xf32>
    %417 = arith.addf %416, %411 : vector<16x128xf32>
    %cst_166 = arith.constant 0.000000e+00 : f32
    %418 = vector.broadcast %cst_166 : f32 to vector<16x128xf32>
    %419 = arith.cmpf ogt, %417, %418 : vector<16x128xf32>
    %c0_167 = arith.constant 0 : index
    %c14_168 = arith.constant 14 : index
    %420 = memref.load %arg8[%c0_167, %c14_168] : memref<2x16xf32, #tpu.memory_space<smem>>
    %c1_169 = arith.constant 1 : index
    %c14_170 = arith.constant 14 : index
    %421 = memref.load %arg8[%c1_169, %c14_170] : memref<2x16xf32, #tpu.memory_space<smem>>
    %422 = vector.broadcast %420 : f32 to vector<16x128xf32>
    %423 = vector.broadcast %421 : f32 to vector<16x128xf32>
    %424 = arith.select %419, %422, %423 : vector<16x128xi1>, vector<16x128xf32>
    %425 = arith.mulf %424, %417 : vector<16x128xf32>
    %426 = arith.addf %400, %425 : vector<16x128xf32>
    %c0_171 = arith.constant 0 : index
    %c15 = arith.constant 15 : index
    %427 = memref.load %arg7[%c0_171, %c15] : memref<3x16xf32, #tpu.memory_space<smem>>
    %428 = vector.broadcast %427 : f32 to vector<16x128xf32>
    %429 = arith.mulf %7, %428 : vector<16x128xf32>
    %c1_172 = arith.constant 1 : index
    %c15_173 = arith.constant 15 : index
    %430 = memref.load %arg7[%c1_172, %c15_173] : memref<3x16xf32, #tpu.memory_space<smem>>
    %431 = vector.broadcast %430 : f32 to vector<16x128xf32>
    %432 = arith.mulf %10, %431 : vector<16x128xf32>
    %433 = arith.addf %429, %432 : vector<16x128xf32>
    %c2_174 = arith.constant 2 : index
    %c15_175 = arith.constant 15 : index
    %434 = memref.load %arg7[%c2_174, %c15_175] : memref<3x16xf32, #tpu.memory_space<smem>>
    %435 = vector.broadcast %434 : f32 to vector<16x128xf32>
    %436 = arith.mulf %13, %435 : vector<16x128xf32>
    %437 = arith.addf %433, %436 : vector<16x128xf32>
    %438 = vector.extract_strided_slice %2 {offsets = [0, 15], sizes = [16, 1], strides = [1, 1]} : vector<16x16xf32> to vector<16x1xf32>
    %439 = vector.extract_strided_slice %1 {offsets = [15, 0], sizes = [1, 128], strides = [1, 1]} : vector<16x128xf32> to vector<1x128xf32>
    %440 = vector.broadcast %438 : vector<16x1xf32> to vector<16x128xf32>
    %441 = vector.broadcast %439 : vector<1x128xf32> to vector<16x128xf32>
    %442 = arith.addf %440, %441 : vector<16x128xf32>
    %443 = arith.addf %442, %437 : vector<16x128xf32>
    %cst_176 = arith.constant 0.000000e+00 : f32
    %444 = vector.broadcast %cst_176 : f32 to vector<16x128xf32>
    %445 = arith.cmpf ogt, %443, %444 : vector<16x128xf32>
    %c0_177 = arith.constant 0 : index
    %c15_178 = arith.constant 15 : index
    %446 = memref.load %arg8[%c0_177, %c15_178] : memref<2x16xf32, #tpu.memory_space<smem>>
    %c1_179 = arith.constant 1 : index
    %c15_180 = arith.constant 15 : index
    %447 = memref.load %arg8[%c1_179, %c15_180] : memref<2x16xf32, #tpu.memory_space<smem>>
    %448 = vector.broadcast %446 : f32 to vector<16x128xf32>
    %449 = vector.broadcast %447 : f32 to vector<16x128xf32>
    %450 = arith.select %445, %448, %449 : vector<16x128xi1>, vector<16x128xf32>
    %451 = arith.mulf %450, %443 : vector<16x128xf32>
    %452 = arith.addf %426, %451 : vector<16x128xf32>
    %cst_181 = arith.constant dense<0xFF800000> : vector<16xf32>
    %453 = vector.multi_reduction <maximumf>, %452, %cst_181 [1] : vector<16x128xf32> to vector<16xf32>
    %454 = vector.shape_cast %453 : vector<16xf32> to vector<16x1xf32>
    %455 = vector.broadcast %454 : vector<16x1xf32> to vector<16x128xf32>
    %456 = arith.subf %452, %455 : vector<16x128xf32>
    %457 = math.exp %456 : vector<16x128xf32>
    %cst_182 = arith.constant dense<0.000000e+00> : vector<16xf32>
    %458 = vector.multi_reduction <add>, %457, %cst_182 [1] : vector<16x128xf32> to vector<16xf32>
    %459 = vector.shape_cast %458 : vector<16xf32> to vector<16x1xf32>
    %460 = tpu.reciprocal %459 {approx = true} : vector<16x1xf32> -> vector<16x1xf32>
    %461 = vector.broadcast %460 : vector<16x1xf32> to vector<16x128xf32>
    %462 = arith.mulf %457, %461 : vector<16x128xf32>
    %cst_183 = arith.constant dense<0.000000e+00> : vector<16x16xf32>
    %463 = tpu.matmul %462, %0, %cst_183 {dimension_numbers = #tpu.dot_dimension_numbers<[1], [0], [0], [1], [0, 0, 1, 1], [], []>} : vector<16x128xf32>, vector<128x16xf32>, vector<16x16xf32> -> vector<16x16xf32>
    %c8_i32_184 = arith.constant 8 : i32
    %464 = vector.broadcast %c8_i32_184 : i32 to vector<1x16xi32>
    %465 = arith.cmpi sge, %14, %464 : vector<1x16xi32>
    %c16_i32 = arith.constant 16 : i32
    %466 = vector.broadcast %c16_i32 : i32 to vector<1x16xi32>
    %467 = arith.cmpi slt, %14, %466 : vector<1x16xi32>
    %468 = arith.andi %465, %467 : vector<1x16xi1>
    %cst_185 = arith.constant 0.000000e+00 : f32
    %469 = vector.shape_cast %468 : vector<1x16xi1> to vector<1x16xi1>
    %470 = vector.broadcast %469 : vector<1x16xi1> to vector<16x16xi1>
    %471 = vector.broadcast %cst_185 : f32 to vector<16x16xf32>
    %472 = arith.select %470, %463, %471 : vector<16x16xi1>, vector<16x16xf32>
    %473 = arith.addf %244, %472 : vector<16x16xf32>
    %cst_186 = arith.constant 0.000000e+00 : f32
    %474 = vector.broadcast %cst_186 : f32 to vector<16x112xf32>
    %475 = tpu.concatenate %473, %474 in 1 : vector<16x16xf32>, vector<16x112xf32> -> vector<16x128xf32>
    %c0_187 = arith.constant 0 : index
    %c0_188 = arith.constant 0 : index
    %476 = vector.load %arg6[%c0_187, %c0_188] : memref<1x128xf32, #tpu.memory_space<vmem>>, vector<1x128xf32>
    %477 = vector.broadcast %476 : vector<1x128xf32> to vector<16x128xf32>
    %478 = arith.addf %475, %477 : vector<16x128xf32>
    %c0_189 = arith.constant 0 : index
    %c0_190 = arith.constant 0 : index
    %479 = vector.load %arg9[%c0_189, %c0_190] : memref<16x128xf32, #tpu.memory_space<vmem>>, vector<16x128xf32>
    tpu.vector_store %arg9[%c0_189, %c0_190], %478 {strides = array<i32>} : memref<16x128xf32, #tpu.memory_space<vmem>>, vector<16x128xf32>,
    return
  }
  func.func @transform_0(%arg0: i32) -> (i32, i32) {
    %c0_i32 = arith.constant 0 : i32
    %c0_i32_0 = arith.constant 0 : i32
    %c0_i32_1 = arith.constant 0 : i32
    return %c0_i32, %c0_i32_0 : i32, i32
  }
  func.func @transform_1(%arg0: i32) -> (i32, i32) {
    %c0_i32 = arith.constant 0 : i32
    %c0_i32_0 = arith.constant 0 : i32
    %c0_i32_1 = arith.constant 0 : i32
    return %c0_i32, %c0_i32_0 : i32, i32
  }
  func.func @transform_2(%arg0: i32) -> (i32, i32) {
    %c0_i32 = arith.constant 0 : i32
    %c0_i32_0 = arith.constant 0 : i32
    return %arg0, %c0_i32 : i32, i32
  }
  func.func @transform_3(%arg0: i32) -> (i32, i32) {
    %c0_i32 = arith.constant 0 : i32
    %c0_i32_0 = arith.constant 0 : i32
    return %arg0, %c0_i32 : i32, i32
  }
  func.func @transform_4(%arg0: i32) -> (i32, i32, i32) {
    %c0_i32 = arith.constant 0 : i32
    %c0_i32_0 = arith.constant 0 : i32
    %c0_i32_1 = arith.constant 0 : i32
    return %c0_i32, %arg0, %c0_i32_0 : i32, i32, i32
  }
  func.func @transform_5(%arg0: i32) -> (i32, i32) {
    %c0_i32 = arith.constant 0 : i32
    %c0_i32_0 = arith.constant 0 : i32
    %c0_i32_1 = arith.constant 0 : i32
    return %c0_i32, %c0_i32_0 : i32, i32
  }
  func.func @transform_6(%arg0: i32) -> (i32, i32) {
    %c0_i32 = arith.constant 0 : i32
    %c0_i32_0 = arith.constant 0 : i32
    %c0_i32_1 = arith.constant 0 : i32
    return %c0_i32, %c0_i32_0 : i32, i32
  }
  func.func @transform_7(%arg0: i32) -> (i32, i32) {
    %c0_i32 = arith.constant 0 : i32
    %c0_i32_0 = arith.constant 0 : i32
    %c0_i32_1 = arith.constant 0 : i32
    return %c0_i32, %c0_i32_0 : i32, i32
  }
  func.func @transform_8(%arg0: i32) -> (i32, i32) {
    %c0_i32 = arith.constant 0 : i32
    %c0_i32_0 = arith.constant 0 : i32
    return %arg0, %c0_i32 : i32, i32
  }
}

</mosaic_0001>

<llo_original>
// kernel: gat_forward.3
$region0: #{gat_forward.3}
  #allocation0 [shape = 'u32[]', space=smem, size = 0x4, offset = 0x4, fixed_abs, tag = 'smem constant byte address 0x4 - core index']
  #allocation1 [shape = 'u32[144,128]{1,0:T(1,128)}', space=vmem, size = 0x12000, scoped, tag = 'internal scratch']
  %s0 = inlined_call_operand.vmem [shape: f32[128,8], index: 0, kind: input, shape index: {}]
  %s1 = inlined_call_operand.vmem [shape: f32[8,128], index: 1, kind: input, shape index: {}]
  %s2 = inlined_call_operand.vmem [shape: f32[16,8], index: 2, kind: input, shape index: {}]
  %s3 = inlined_call_operand.vmem [shape: bf16[16,128], index: 3, kind: input, shape index: {}]
  %s4 = inlined_call_operand.vmem [shape: bf16[3,16,128], index: 4, kind: input, shape index: {}]
  %s5 = inlined_call_operand.vmem [shape: f32[1,128], index: 5, kind: input, shape index: {}]
  %s6 = inlined_call_operand.vmem [shape: f32[3,8], index: 6, kind: input, shape index: {}]
  %s7 = inlined_call_operand.vmem [shape: f32[2,8], index: 7, kind: input, shape index: {}]
  %s8 = inlined_call_operand.vmem [shape: f32[16,128], index: 8, kind: output, shape index: {}]
  %s9 = sld [smem:[#allocation0]]
  $region50: #{gat_forward.3} parent=0
    _
  %s11 = ssub.s32 1, %s9
  %s12 = scalar_select 0, %s11, %s9
  $region1: #{gat_forward.3} parent=0
    #allocation2 [shape = 'u8[2048]{0}', space=smem, size = 0x800, scoped, tag = 'input window, operand 6, single buffered']
    #allocation3 [shape = 's32[1]{0}', space=sflag, size = 0x4, scoped, tag = 'scoped memory for gat_forward.3']
    #allocation4 [shape = 'u8[1024]{0}', space=smem, size = 0x400, scoped, tag = 'input window, operand 7, single buffered']
    #allocation5 [shape = 's32[1]{0}', space=sflag, size = 0x4, scoped, tag = 'scoped memory for gat_forward.3']
    %13 = vsyncpa [#allocation3], 0
    %14 = vsyncpa [#allocation5], 0
    // Predicated region
    $region2: #{gat_forward.3} parent=1 // pred_check
      _
    $region3: #{gat_forward.3} parent=1 // pred_check_branch
      %16 = sbr.rel (0) target = $region5
    $region4: #{gat_forward.3} parent=1 // pred_region
      _
    $region5: #{gat_forward.3} parent=1 // pred_fallthru
      _
    // Predicated region
    $region6: #{gat_forward.3} parent=1 // pred_check
      _
    $region7: #{gat_forward.3} parent=1 // pred_check_branch
      %18 = sbr.rel (0) target = $region9
    $region8: #{gat_forward.3} parent=1 // pred_region
      _
    $region9: #{gat_forward.3} parent=1 // pred_fallthru
      _
    // Predicated region
    $region10: #{gat_forward.3} parent=1 // pred_check
      _
    $region11: #{gat_forward.3} parent=1 // pred_check_branch
      %20 = sbr.rel (0) target = $region13
    $region12: #{gat_forward.3} parent=1 // pred_region
      _
    $region13: #{gat_forward.3} parent=1 // pred_fallthru
      _
    // Predicated region
    $region14: #{gat_forward.3} parent=1 // pred_check
      _
    $region15: #{gat_forward.3} parent=1 // pred_check_branch
      %22 = sbr.rel (0) target = $region17
    $region16: #{gat_forward.3} parent=1 // pred_region
      _
    $region17: #{gat_forward.3} parent=1 // pred_fallthru
      _
    // Predicated region
    $region18: #{gat_forward.3} parent=1 // pred_check
      _
    $region19: #{gat_forward.3} parent=1 // pred_check_branch
      %24 = sbr.rel (0) target = $region21
    $region20: #{gat_forward.3} parent=1 // pred_region
      _
    $region21: #{gat_forward.3} parent=1 // pred_fallthru
      _
    // Predicated region
    $region22: #{gat_forward.3} parent=1 // pred_check
      _
    $region23: #{gat_forward.3} parent=1 // pred_check_branch
      %26 = sbr.rel (0) target = $region25
    $region24: #{gat_forward.3} parent=1 // pred_region
      _
    $region25: #{gat_forward.3} parent=1 // pred_fallthru
      _
    // Predicated region
    $region26: #{gat_forward.3} parent=1 // pred_check
      _
    $region27: #{gat_forward.3} parent=1 // pred_check_branch
      %28 = sbr.rel (0) target = $region29
    $region28: #{gat_forward.3} parent=1 // pred_region
      %s30 = ssub.s32 64, 64
      %31 = vsyncadd [#allocation3], %s30
      %s33 = sshll.u32 %s6, 4
      %s34 = int_to_ptr.vmem [resolvable:$true] %s33
      %36 = dma.vmem_to_smem %s34, 64, [#allocation2], [#allocation3]
    $region29: #{gat_forward.3} parent=1 // pred_fallthru
      _
    // Predicated region
    $region30: #{gat_forward.3} parent=1 // pred_check
      _
    $region31: #{gat_forward.3} parent=1 // pred_check_branch
      %38 = sbr.rel (0) target = $region33
    $region32: #{gat_forward.3} parent=1 // pred_region
      %s40 = ssub.s32 32, 32
      %41 = vsyncadd [#allocation5], %s40
      %s43 = sshll.u32 %s7, 4
      %s44 = int_to_ptr.vmem [resolvable:$true] %s43
      %46 = dma.vmem_to_smem %s44, 32, [#allocation4], [#allocation5]
    $region33: #{gat_forward.3} parent=1 // pred_fallthru
      _
    // Predicated region
    $region34: #{gat_forward.3} parent=1 // pred_check
      _
    $region35: #{gat_forward.3} parent=1 // pred_check_branch
      %48 = sbr.rel (0) target = $region37
    $region36: #{gat_forward.3} parent=1 // pred_region
      %49 = dma.done [#allocation3], 64
    $region37: #{gat_forward.3} parent=1 // pred_fallthru
      _
    // Predicated region
    $region38: #{gat_forward.3} parent=1 // pred_check
      _
    $region39: #{gat_forward.3} parent=1 // pred_check_branch
      %51 = sbr.rel (0) target = $region41
    $region40: #{gat_forward.3} parent=1 // pred_region
      %52 = dma.done [#allocation5], 32
    $region41: #{gat_forward.3} parent=1 // pred_fallthru
      _
    %53 = sfence
    %v54 = vld [vmem:[%s0] sm:$0xff]
    %v55 = vld [vmem:[%s0 + $0x8] sm:$0xff]
    %v56 = vld [vmem:[%s0 + $0x10] sm:$0xff]
    %v57 = vld [vmem:[%s0 + $0x18] sm:$0xff]
    %v58 = vld [vmem:[%s0 + $0x20] sm:$0xff]
    %v59 = vld [vmem:[%s0 + $0x28] sm:$0xff]
    %v60 = vld [vmem:[%s0 + $0x30] sm:$0xff]
    %v61 = vld [vmem:[%s0 + $0x38] sm:$0xff]
    %v62 = vld [vmem:[%s0 + $0x40] sm:$0xff]
    %v63 = vld [vmem:[%s0 + $0x48] sm:$0xff]
    %v64 = vld [vmem:[%s0 + $0x50] sm:$0xff]
    %v65 = vld [vmem:[%s0 + $0x58] sm:$0xff]
    %v66 = vld [vmem:[%s0 + $0x60] sm:$0xff]
    %v67 = vld [vmem:[%s0 + $0x68] sm:$0xff]
    %v68 = vld [vmem:[%s0 + $0x70] sm:$0xff]
    %v69 = vld [vmem:[%s0 + $0x78] sm:$0xff]
    %v70 = vld [vmem:[%s1] sm:$0xff]
    %v71 = vld [vmem:[%s2] sm:$0xff]
    %v72 = vld [vmem:[%s2 + $0x8] sm:$0xff]
    %v73 = vld [vmem:[%s3] sm:$0xf]
    %v74 = vld [vmem:[%s3 + $0x4] sm:$0xf]
    %v75 = vunpack.c.l.bf16 %v73
    %v76 = vunpack.c.l.bf16 %v74
    %v77 = vld [vmem:[%s4] sm:$0xf]
    %v78 = vld [vmem:[%s4 + $0x4] sm:$0xf]
    %v79 = vunpack.c.l.bf16 %v77
    %v80 = vunpack.c.l.bf16 %v78
    %s81 = scalar_lea.vmem %s4, 8
    %v82 = vld [vmem:[%s81] sm:$0xf]
    %v83 = vld [vmem:[%s81 + $0x4] sm:$0xf]
    %v84 = vunpack.c.l.bf16 %v82
    %v85 = vunpack.c.l.bf16 %v83
    %s86 = scalar_lea.vmem %s4, 16
    %v87 = vld [vmem:[%s86] sm:$0xf]
    %v88 = vld [vmem:[%s86 + $0x4] sm:$0xf]
    %v89 = vunpack.c.l.bf16 %v87
    %v90 = vunpack.c.l.bf16 %v88
    %s91 = sld [smem:[#allocation2]]
    %v92 = vstv %s91
    %v93 = vmul.f32 %v79, %v92
    %v94 = vmul.f32 %v80, %v92
    %s95 = sld [smem:[#allocation2 + $0x80]]
    %v96 = vstv %s95
    %v97 = vmul.f32 %v84, %v96
    %v98 = vmul.f32 %v85, %v96
    %v99 = vadd.f32 %v93, %v97
    %v100 = vadd.f32 %v94, %v98
    %s101 = sld [smem:[#allocation2 + $0x100]]
    %v102 = vstv %s101
    %v103 = vmul.f32 %v89, %v102
    %v104 = vmul.f32 %v90, %v102
    %v105 = vadd.f32 %v99, %v103
    %v106 = vadd.f32 %v100, %v104
    %108 = vset.pattern.permute.xlu0 0
    %109 = vperm.xlu0 %108, %v71
    %v110 = vpop.permute.xlu0 %109
    %113 = vset.pattern.permute.xlu0 0
    %114 = vperm.xlu0 %113, %v72
    %v115 = vpop.permute.xlu0 %114
    %v117 = vlaneseq
    %v118 = vshrl.u32 %v117, 7
    %v119 = vsub.s32 0, %v118
    %v120 = vrot.slane %v70, %v119
    %v121 = vadd.f32 %v110, %v120
    %v122 = vadd.f32 %v115, %v120
    %v123 = vadd.f32 %v121, %v105
    %v124 = vadd.f32 %v122, %v106
    %vm125 = vcmp.gt.f32.partialorder %v123, 0.0
    %vm126 = vcmp.gt.f32.partialorder %v124, 0.0
    %s127 = sld [smem:[#allocation4]]
    %s128 = sld [smem:[#allocation4 + $0x80]]
    %v129 = vstv %s127
    %v130 = vstv %s128
    %v131 = vsel %vm125, %v129, %v130
    %v132 = vsel %vm126, %v129, %v130
    %v133 = vmul.f32 %v131, %v123
    %v134 = vmul.f32 %v132, %v124
    %v135 = vadd.f32 %v75, %v133
    %v136 = vadd.f32 %v76, %v134
    %s137 = sld [smem:[#allocation2 + $0x1]]
    %v138 = vstv %s137
    %v139 = vmul.f32 %v79, %v138
    %v140 = vmul.f32 %v80, %v138
    %s141 = sld [smem:[#allocation2 + $0x81]]
    %v142 = vstv %s141
    %v143 = vmul.f32 %v84, %v142
    %v144 = vmul.f32 %v85, %v142
    %v145 = vadd.f32 %v139, %v143
    %v146 = vadd.f32 %v140, %v144
    %s147 = sld [smem:[#allocation2 + $0x101]]
    %v148 = vstv %s147
    %v149 = vmul.f32 %v89, %v148
    %v150 = vmul.f32 %v90, %v148
    %v151 = vadd.f32 %v145, %v149
    %v152 = vadd.f32 %v146, %v150
    %153 = vset.pattern.permute.xlu0 1
    %154 = vperm.xlu0 %153, %v71
    %v155 = vpop.permute.xlu0 %154
    %157 = vset.pattern.permute.xlu0 1
    %158 = vperm.xlu0 %157, %v72
    %v159 = vpop.permute.xlu0 %158
    %v161 = vlaneseq
    %v162 = vshrl.u32 %v161, 7
    %v163 = vsub.s32 1, %v162
    %v164 = vrot.slane %v70, %v163
    %v165 = vadd.f32 %v155, %v164
    %v166 = vadd.f32 %v159, %v164
    %v167 = vadd.f32 %v165, %v151
    %v168 = vadd.f32 %v166, %v152
    %vm169 = vcmp.gt.f32.partialorder %v167, 0.0
    %vm170 = vcmp.gt.f32.partialorder %v168, 0.0
    %s171 = sld [smem:[#allocation4 + $0x1]]
    %s172 = sld [smem:[#allocation4 + $0x81]]
    %v173 = vstv %s171
    %v174 = vstv %s172
    %v175 = vsel %vm169, %v173, %v174
    %v176 = vsel %vm170, %v173, %v174
    %v177 = vmul.f32 %v175, %v167
    %v178 = vmul.f32 %v176, %v168
    %v179 = vadd.f32 %v135, %v177
    %v180 = vadd.f32 %v136, %v178
    %s181 = sld [smem:[#allocation2 + $0x2]]
    %v182 = vstv %s181
    %v183 = vmul.f32 %v79, %v182
    %v184 = vmul.f32 %v80, %v182
    %s185 = sld [smem:[#allocation2 + $0x82]]
    %v186 = vstv %s185
    %v187 = vmul.f32 %v84, %v186
    %v188 = vmul.f32 %v85, %v186
    %v189 = vadd.f32 %v183, %v187
    %v190 = vadd.f32 %v184, %v188
    %s191 = sld [smem:[#allocation2 + $0x102]]
    %v192 = vstv %s191
    %v193 = vmul.f32 %v89, %v192
    %v194 = vmul.f32 %v90, %v192
    %v195 = vadd.f32 %v189, %v193
    %v196 = vadd.f32 %v190, %v194
    %197 = vset.pattern.permute.xlu0 2
    %198 = vperm.xlu0 %197, %v71
    %v199 = vpop.permute.xlu0 %198
    %201 = vset.pattern.permute.xlu0 2
    %202 = vperm.xlu0 %201, %v72
    %v203 = vpop.permute.xlu0 %202
    %v205 = vlaneseq
    %v206 = vshrl.u32 %v205, 7
    %v207 = vsub.s32 2, %v206
    %v208 = vrot.slane %v70, %v207
    %v209 = vadd.f32 %v199, %v208
    %v210 = vadd.f32 %v203, %v208
    %v211 = vadd.f32 %v209, %v195
    %v212 = vadd.f32 %v210, %v196
    %vm213 = vcmp.gt.f32.partialorder %v211, 0.0
    %vm214 = vcmp.gt.f32.partialorder %v212, 0.0
    %s215 = sld [smem:[#allocation4 + $0x2]]
    %s216 = sld [smem:[#allocation4 + $0x82]]
    %v217 = vstv %s215
    %v218 = vstv %s216
    %v219 = vsel %vm213, %v217, %v218
    %v220 = vsel %vm214, %v217, %v218
    %v221 = vmul.f32 %v219, %v211
    %v222 = vmul.f32 %v220, %v212
    %v223 = vadd.f32 %v179, %v221
    %v224 = vadd.f32 %v180, %v222
    %s225 = sld [smem:[#allocation2 + $0x3]]
    %v226 = vstv %s225
    %v227 = vmul.f32 %v79, %v226
    %v228 = vmul.f32 %v80, %v226
    %s229 = sld [smem:[#allocation2 + $0x83]]
    %v230 = vstv %s229
    %v231 = vmul.f32 %v84, %v230
    %v232 = vmul.f32 %v85, %v230
    %v233 = vadd.f32 %v227, %v231
    %v234 = vadd.f32 %v228, %v232
    %s235 = sld [smem:[#allocation2 + $0x103]]
    %v236 = vstv %s235
    %v237 = vmul.f32 %v89, %v236
    %v238 = vmul.f32 %v90, %v236
    %v239 = vadd.f32 %v233, %v237
    %v240 = vadd.f32 %v234, %v238
    %241 = vset.pattern.permute.xlu0 3
    %242 = vperm.xlu0 %241, %v71
    %v243 = vpop.permute.xlu0 %242
    %245 = vset.pattern.permute.xlu0 3
    %246 = vperm.xlu0 %245, %v72
    %v247 = vpop.permute.xlu0 %246
    %v249 = vlaneseq
    %v250 = vshrl.u32 %v249, 7
    %v251 = vsub.s32 3, %v250
    %v252 = vrot.slane %v70, %v251
    %v253 = vadd.f32 %v243, %v252
    %v254 = vadd.f32 %v247, %v252
    %v255 = vadd.f32 %v253, %v239
    %v256 = vadd.f32 %v254, %v240
    %vm257 = vcmp.gt.f32.partialorder %v255, 0.0
    %vm258 = vcmp.gt.f32.partialorder %v256, 0.0
    %s259 = sld [smem:[#allocation4 + $0x3]]
    %s260 = sld [smem:[#allocation4 + $0x83]]
    %v261 = vstv %s259
    %v262 = vstv %s260
    %v263 = vsel %vm257, %v261, %v262
    %v264 = vsel %vm258, %v261, %v262
    %v265 = vmul.f32 %v263, %v255
    %v266 = vmul.f32 %v264, %v256
    %v267 = vadd.f32 %v223, %v265
    %v268 = vadd.f32 %v224, %v266
    %s269 = sld [smem:[#allocation2 + $0x4]]
    %v270 = vstv %s269
    %v271 = vmul.f32 %v79, %v270
    %v272 = vmul.f32 %v80, %v270
    %s273 = sld [smem:[#allocation2 + $0x84]]
    %v274 = vstv %s273
    %v275 = vmul.f32 %v84, %v274
    %v276 = vmul.f32 %v85, %v274
    %v277 = vadd.f32 %v271, %v275
    %v278 = vadd.f32 %v272, %v276
    %s279 = sld [smem:[#allocation2 + $0x104]]
    %v280 = vstv %s279
    %v281 = vmul.f32 %v89, %v280
    %v282 = vmul.f32 %v90, %v280
    %v283 = vadd.f32 %v277, %v281
    %v284 = vadd.f32 %v278, %v282
    %285 = vset.pattern.permute.xlu0 4
    %286 = vperm.xlu0 %285, %v71
    %v287 = vpop.permute.xlu0 %286
    %289 = vset.pattern.permute.xlu0 4
    %290 = vperm.xlu0 %289, %v72
    %v291 = vpop.permute.xlu0 %290
    %v293 = vlaneseq
    %v294 = vshrl.u32 %v293, 7
    %v295 = vsub.s32 4, %v294
    %v296 = vrot.slane %v70, %v295
    %v297 = vadd.f32 %v287, %v296
    %v298 = vadd.f32 %v291, %v296
    %v299 = vadd.f32 %v297, %v283
    %v300 = vadd.f32 %v298, %v284
    %vm301 = vcmp.gt.f32.partialorder %v299, 0.0
    %vm302 = vcmp.gt.f32.partialorder %v300, 0.0
    %s303 = sld [smem:[#allocation4 + $0x4]]
    %s304 = sld [smem:[#allocation4 + $0x84]]
    %v305 = vstv %s303
    %v306 = vstv %s304
    %v307 = vsel %vm301, %v305, %v306
    %v308 = vsel %vm302, %v305, %v306
    %v309 = vmul.f32 %v307, %v299
    %v310 = vmul.f32 %v308, %v300
    %v311 = vadd.f32 %v267, %v309
    %v312 = vadd.f32 %v268, %v310
    %s313 = sld [smem:[#allocation2 + $0x5]]
    %v314 = vstv %s313
    %v315 = vmul.f32 %v79, %v314
    %v316 = vmul.f32 %v80, %v314
    %s317 = sld [smem:[#allocation2 + $0x85]]
    %v318 = vstv %s317
    %v319 = vmul.f32 %v84, %v318
    %v320 = vmul.f32 %v85, %v318
    %v321 = vadd.f32 %v315, %v319
    %v322 = vadd.f32 %v316, %v320
    %s323 = sld [smem:[#allocation2 + $0x105]]
    %v324 = vstv %s323
    %v325 = vmul.f32 %v89, %v324
    %v326 = vmul.f32 %v90, %v324
    %v327 = vadd.f32 %v321, %v325
    %v328 = vadd.f32 %v322, %v326
    %329 = vset.pattern.permute.xlu0 5
    %330 = vperm.xlu0 %329, %v71
    %v331 = vpop.permute.xlu0 %330
    %333 = vset.pattern.permute.xlu0 5
    %334 = vperm.xlu0 %333, %v72
    %v335 = vpop.permute.xlu0 %334
    %v337 = vlaneseq
    %v338 = vshrl.u32 %v337, 7
    %v339 = vsub.s32 5, %v338
    %v340 = vrot.slane %v70, %v339
    %v341 = vadd.f32 %v331, %v340
    %v342 = vadd.f32 %v335, %v340
    %v343 = vadd.f32 %v341, %v327
    %v344 = vadd.f32 %v342, %v328
    %vm345 = vcmp.gt.f32.partialorder %v343, 0.0
    %vm346 = vcmp.gt.f32.partialorder %v344, 0.0
    %s347 = sld [smem:[#allocation4 + $0x5]]
    %s348 = sld [smem:[#allocation4 + $0x85]]
    %v349 = vstv %s347
    %v350 = vstv %s348
    %v351 = vsel %vm345, %v349, %v350
    %v352 = vsel %vm346, %v349, %v350
    %v353 = vmul.f32 %v351, %v343
    %v354 = vmul.f32 %v352, %v344
    %v355 = vadd.f32 %v311, %v353
    %v356 = vadd.f32 %v312, %v354
    %s357 = sld [smem:[#allocation2 + $0x6]]
    %v358 = vstv %s357
    %v359 = vmul.f32 %v79, %v358
    %v360 = vmul.f32 %v80, %v358
    %s361 = sld [smem:[#allocation2 + $0x86]]
    %v362 = vstv %s361
    %v363 = vmul.f32 %v84, %v362
    %v364 = vmul.f32 %v85, %v362
    %v365 = vadd.f32 %v359, %v363
    %v366 = vadd.f32 %v360, %v364
    %s367 = sld [smem:[#allocation2 + $0x106]]
    %v368 = vstv %s367
    %v369 = vmul.f32 %v89, %v368
    %v370 = vmul.f32 %v90, %v368
    %v371 = vadd.f32 %v365, %v369
    %v372 = vadd.f32 %v366, %v370
    %373 = vset.pattern.permute.xlu0 6
    %374 = vperm.xlu0 %373, %v71
    %v375 = vpop.permute.xlu0 %374
    %377 = vset.pattern.permute.xlu0 6
    %378 = vperm.xlu0 %377, %v72
    %v379 = vpop.permute.xlu0 %378
    %v381 = vlaneseq
    %v382 = vshrl.u32 %v381, 7
    %v383 = vsub.s32 6, %v382
    %v384 = vrot.slane %v70, %v383
    %v385 = vadd.f32 %v375, %v384
    %v386 = vadd.f32 %v379, %v384
    %v387 = vadd.f32 %v385, %v371
    %v388 = vadd.f32 %v386, %v372
    %vm389 = vcmp.gt.f32.partialorder %v387, 0.0
    %vm390 = vcmp.gt.f32.partialorder %v388, 0.0
    %s391 = sld [smem:[#allocation4 + $0x6]]
    %s392 = sld [smem:[#allocation4 + $0x86]]
    %v393 = vstv %s391
    %v394 = vstv %s392
    %v395 = vsel %vm389, %v393, %v394
    %v396 = vsel %vm390, %v393, %v394
    %v397 = vmul.f32 %v395, %v387
    %v398 = vmul.f32 %v396, %v388
    %v399 = vadd.f32 %v355, %v397
    %v400 = vadd.f32 %v356, %v398
    %s401 = sld [smem:[#allocation2 + $0x7]]
    %v402 = vstv %s401
    %v403 = vmul.f32 %v79, %v402
    %v404 = vmul.f32 %v80, %v402
    %s405 = sld [smem:[#allocation2 + $0x87]]
    %v406 = vstv %s405
    %v407 = vmul.f32 %v84, %v406
    %v408 = vmul.f32 %v85, %v406
    %v409 = vadd.f32 %v403, %v407
    %v410 = vadd.f32 %v404, %v408
    %s411 = sld [smem:[#allocation2 + $0x107]]
    %v412 = vstv %s411
    %v413 = vmul.f32 %v89, %v412
    %v414 = vmul.f32 %v90, %v412
    %v415 = vadd.f32 %v409, %v413
    %v416 = vadd.f32 %v410, %v414
    %417 = vset.pattern.permute.xlu0 7
    %418 = vperm.xlu0 %417, %v71
    %v419 = vpop.permute.xlu0 %418
    %421 = vset.pattern.permute.xlu0 7
    %422 = vperm.xlu0 %421, %v72
    %v423 = vpop.permute.xlu0 %422
    %v425 = vlaneseq
    %v426 = vshrl.u32 %v425, 7
    %v427 = vsub.s32 7, %v426
    %v428 = vrot.slane %v70, %v427
    %v429 = vadd.f32 %v419, %v428
    %v430 = vadd.f32 %v423, %v428
    %v431 = vadd.f32 %v429, %v415
    %v432 = vadd.f32 %v430, %v416
    %vm433 = vcmp.gt.f32.partialorder %v431, 0.0
    %vm434 = vcmp.gt.f32.partialorder %v432, 0.0
    %s435 = sld [smem:[#allocation4 + $0x7]]
    %s436 = sld [smem:[#allocation4 + $0x87]]
    %v437 = vstv %s435
    %v438 = vstv %s436
    %v439 = vsel %vm433, %v437, %v438
    %v440 = vsel %vm434, %v437, %v438
    %v441 = vmul.f32 %v439, %v431
    %v442 = vmul.f32 %v440, %v432
    %v443 = vadd.f32 %v399, %v441
    %v444 = vadd.f32 %v400, %v442
    %445 = vmax.xlane.f32.xlu0 %v443
    %v446 = vpop.xlane.xlu0 %445
    %447 = vmax.xlane.f32.xlu0 %v444
    %v448 = vpop.xlane.xlu0 %447
    %v449 = vsub.f32 %v443, %v446
    %v450 = vsub.f32 %v444, %v448
    %v451 = vmul.f32 %v449, 1.442695
    %v452 = vpow.pop %v451
    %v453 = vmul.f32 %v450, 1.442695
    %v454 = vpow.pop %v453
    %455 = vadd.xlane.f32.xlu0 %v452
    %v456 = vpop.xlane.xlu0 %455
    %457 = vadd.xlane.f32.xlu0 %v454
    %v458 = vpop.xlane.xlu0 %457
    %v459 = vrcp.pop %v456
    %v460 = vrcp.pop %v458
    %v461 = vmul.f32 %v452, %v459
    %v462 = vmul.f32 %v454, %v460
    %463 = vmatprep.subr.mxu0 0.0
    %464 = vmatpush1.msra.mxu0 %v54
    %465 = vmatprep.subr.mxu0 0.0
    %466 = vmatpush1.msra.mxu0 %v55
    %467 = vmatprep.subr.mxu0 0.0
    %468 = vmatpush1.msra.mxu0 %v56
    %469 = vmatprep.subr.mxu0 0.0
    %470 = vmatpush1.msra.mxu0 %v57
    %471 = vmatprep.subr.mxu0 0.0
    %472 = vmatpush1.msra.mxu0 %v58
    %473 = vmatprep.subr.mxu0 0.0
    %474 = vmatpush1.msra.mxu0 %v59
    %475 = vmatprep.subr.mxu0 0.0
    %476 = vmatpush1.msra.mxu0 %v60
    %477 = vmatprep.subr.mxu0 0.0
    %478 = vmatpush1.msra.mxu0 %v61
    %479 = vmatprep.subr.mxu0 0.0
    %480 = vmatpush1.msra.mxu0 %v62
    %481 = vmatprep.subr.mxu0 0.0
    %482 = vmatpush1.msra.mxu0 %v63
    %483 = vmatprep.subr.mxu0 0.0
    %484 = vmatpush1.msra.mxu0 %v64
    %485 = vmatprep.subr.mxu0 0.0
    %486 = vmatpush1.msra.mxu0 %v65
    %487 = vmatprep.subr.mxu0 0.0
    %488 = vmatpush1.msra.mxu0 %v66
    %489 = vmatprep.subr.mxu0 0.0
    %490 = vmatpush1.msra.mxu0 %v67
    %491 = vmatprep.subr.mxu0 0.0
    %492 = vmatpush1.msra.mxu0 %v68
    %493 = vmatprep.subr.mxu0 0.0
    %494 = vmatpush1.msra.mxu0 %v69
    %495 = vmatprep.subr.mxu0 0.0
    %496 = vmatpush1.msra.mxu0 0.0
    %497 = vmatprep.subr.mxu0 0.0
    %498 = vmatpush1.msra.mxu0 0.0
    %499 = vmatprep.subr.mxu0 0.0
    %500 = vmatpush1.msra.mxu0 0.0
    %501 = vmatprep.subr.mxu0 0.0
    %502 = vmatpush1.msra.mxu0 0.0
    %503 = vmatprep.subr.mxu0 0.0
    %504 = vmatpush1.msra.mxu0 0.0
    %505 = vmatprep.subr.mxu0 0.0
    %506 = vmatpush1.msra.mxu0 0.0
    %507 = vmatprep.subr.mxu0 0.0
    %508 = vmatpush1.msra.mxu0 0.0
    %509 = vmatprep.subr.mxu0 0.0
    %510 = vmatpush1.msra.mxu0 0.0
    %511 = vmatprep.subr.mxu0 0.0
    %512 = vmatpush1.msra.mxu0 0.0
    %513 = vmatprep.subr.mxu0 0.0
    %514 = vmatpush1.msra.mxu0 0.0
    %515 = vmatprep.subr.mxu0 0.0
    %516 = vmatpush1.msra.mxu0 0.0
    %517 = vmatprep.subr.mxu0 0.0
    %518 = vmatpush1.msra.mxu0 0.0
    %519 = vmatprep.subr.mxu0 0.0
    %520 = vmatpush1.msra.mxu0 0.0
    %521 = vmatprep.subr.mxu0 0.0
    %522 = vmatpush1.msra.mxu0 0.0
    %523 = vmatprep.subr.mxu0 0.0
    %524 = vmatpush1.msra.mxu0 0.0
    %525 = vmatprep.subr.mxu0 0.0
    %526 = vmatpush1.msra.mxu0 0.0
    %527 = vmatprep.mubr.f32.mxu0 0.0
    %528 = vmatmul.mubr.f32.gmra.mrb[0].mxu0 %v461
    %v529 = vpop.f32.mrb[0].mxu0
    %v530 = vadd.f32 0.0, %v529
    %v531 = vpop.f32.mrb[0].mxu0
    %532 = vmatprep.mubr.f32.mxu0 0.0
    %533 = vmatmul.mubr.f32.gmra.mrb[0].mxu0 %v462
    %v534 = vpop.f32.mrb[0].mxu0
    %v535 = vadd.f32 0.0, %v534
    %v536 = vpop.f32.mrb[0].mxu0
    %537 = vdwg.mxu0
    %vm538 = vcmask 64512
    %v539 = vsel %vm538, %v530, 0.0
    %v540 = vsel %vm538, %v535, 0.0
    %v541 = vld [vmem:[%s5] sm:$0x1]
    %v543 = vlaneseq
    %v544 = vshrl.u32 %v543, 7
    %v545 = vsub.s32 0, %v544
    %v546 = vrot.slane %v541, %v545
    %v548 = vadd.f32 %v539, %v546
    %v549 = vadd.f32 %v540, %v546
    %550 = vst [vmem:[%s8] sm:$0xff] %v548
    %551 = vst [vmem:[%s8 + $0x8] sm:$0xff] %v549
    // Predicated region
    $region42: #{gat_forward.3} parent=1 // pred_check
      _
    $region43: #{gat_forward.3} parent=1 // pred_check_branch
      %553 = sbr.rel (0) target = $region45
    $region44: #{gat_forward.3} parent=1 // pred_region
      _
    $region45: #{gat_forward.3} parent=1 // pred_fallthru
      _
    // Predicated region
    $region46: #{gat_forward.3} parent=1 // pred_check
      _
    $region47: #{gat_forward.3} parent=1 // pred_check_branch
      %555 = sbr.rel (0) target = $region49
    $region48: #{gat_forward.3} parent=1 // pred_region
      _
    $region49: #{gat_forward.3} parent=1 // pred_fallthru
      _
    %556 = vsyncpa [#allocation3], 1
    %557 = vsyncpa [#allocation5], 1

// kernel: gat_forward.2
$region0: #{gat_forward.2}
  #allocation0 [shape = 'u32[]', space=smem, size = 0x4, offset = 0x4, fixed_abs, tag = 'smem constant byte address 0x4 - core index']
  #allocation1 [shape = 'u32[144,128]{1,0:T(1,128)}', space=vmem, size = 0x12000, scoped, tag = 'internal scratch']
  %s0 = inlined_call_operand.vmem [shape: f32[128,16], index: 0, kind: input, shape index: {}]
  %s1 = inlined_call_operand.vmem [shape: f32[16,128], index: 1, kind: input, shape index: {}]
  %s2 = inlined_call_operand.vmem [shape: f32[16,16], index: 2, kind: input, shape index: {}]
  %s3 = inlined_call_operand.vmem [shape: bf16[16,128], index: 3, kind: input, shape index: {}]
  %s4 = inlined_call_operand.vmem [shape: bf16[3,16,128], index: 4, kind: input, shape index: {}]
  %s5 = inlined_call_operand.vmem [shape: f32[1,128], index: 5, kind: input, shape index: {}]
  %s6 = inlined_call_operand.vmem [shape: f32[3,16], index: 6, kind: input, shape index: {}]
  %s7 = inlined_call_operand.vmem [shape: f32[2,16], index: 7, kind: input, shape index: {}]
  %s8 = inlined_call_operand.vmem [shape: f32[16,128], index: 8, kind: output, shape index: {}]
  %s9 = sld [smem:[#allocation0]]
  $region50: #{gat_forward.2} parent=0
    _
  %s11 = ssub.s32 1, %s9
  %s12 = scalar_select 0, %s11, %s9
  $region1: #{gat_forward.2} parent=0
    #allocation2 [shape = 'u8[2048]{0}', space=smem, size = 0x800, scoped, tag = 'input window, operand 6, single buffered']
    #allocation3 [shape = 's32[1]{0}', space=sflag, size = 0x4, scoped, tag = 'scoped memory for gat_forward.2']
    #allocation4 [shape = 'u8[1024]{0}', space=smem, size = 0x400, scoped, tag = 'input window, operand 7, single buffered']
    #allocation5 [shape = 's32[1]{0}', space=sflag, size = 0x4, scoped, tag = 'scoped memory for gat_forward.2']
    %13 = vsyncpa [#allocation3], 0
    %14 = vsyncpa [#allocation5], 0
    // Predicated region
    $region2: #{gat_forward.2} parent=1 // pred_check
      _
    $region3: #{gat_forward.2} parent=1 // pred_check_branch
      %16 = sbr.rel (0) target = $region5
    $region4: #{gat_forward.2} parent=1 // pred_region
      _
    $region5: #{gat_forward.2} parent=1 // pred_fallthru
      _
    // Predicated region
    $region6: #{gat_forward.2} parent=1 // pred_check
      _
    $region7: #{gat_forward.2} parent=1 // pred_check_branch
      %18 = sbr.rel (0) target = $region9
    $region8: #{gat_forward.2} parent=1 // pred_region
      _
    $region9: #{gat_forward.2} parent=1 // pred_fallthru
      _
    // Predicated region
    $region10: #{gat_forward.2} parent=1 // pred_check
      _
    $region11: #{gat_forward.2} parent=1 // pred_check_branch
      %20 = sbr.rel (0) target = $region13
    $region12: #{gat_forward.2} parent=1 // pred_region
      _
    $region13: #{gat_forward.2} parent=1 // pred_fallthru
      _
    // Predicated region
    $region14: #{gat_forward.2} parent=1 // pred_check
      _
    $region15: #{gat_forward.2} parent=1 // pred_check_branch
      %22 = sbr.rel (0) target = $region17
    $region16: #{gat_forward.2} parent=1 // pred_region
      _
    $region17: #{gat_forward.2} parent=1 // pred_fallthru
      _
    // Predicated region
    $region18: #{gat_forward.2} parent=1 // pred_check
      _
    $region19: #{gat_forward.2} parent=1 // pred_check_branch
      %24 = sbr.rel (0) target = $region21
    $region20: #{gat_forward.2} parent=1 // pred_region
      _
    $region21: #{gat_forward.2} parent=1 // pred_fallthru
      _
    // Predicated region
    $region22: #{gat_forward.2} parent=1 // pred_check
      _
    $region23: #{gat_forward.2} parent=1 // pred_check_branch
      %26 = sbr.rel (0) target = $region25
    $region24: #{gat_forward.2} parent=1 // pred_region
      _
    $region25: #{gat_forward.2} parent=1 // pred_fallthru
      _
    // Predicated region
    $region26: #{gat_forward.2} parent=1 // pred_check
      _
    $region27: #{gat_forward.2} parent=1 // pred_check_branch
      %28 = sbr.rel (0) target = $region29
    $region28: #{gat_forward.2} parent=1 // pred_region
      %s30 = ssub.s32 64, 64
      %31 = vsyncadd [#allocation3], %s30
      %s33 = sshll.u32 %s6, 4
      %s34 = int_to_ptr.vmem [resolvable:$true] %s33
      %36 = dma.vmem_to_smem %s34, 64, [#allocation2], [#allocation3]
    $region29: #{gat_forward.2} parent=1 // pred_fallthru
      _
    // Predicated region
    $region30: #{gat_forward.2} parent=1 // pred_check
      _
    $region31: #{gat_forward.2} parent=1 // pred_check_branch
      %38 = sbr.rel (0) target = $region33
    $region32: #{gat_forward.2} parent=1 // pred_region
      %s40 = ssub.s32 32, 32
      %41 = vsyncadd [#allocation5], %s40
      %s43 = sshll.u32 %s7, 4
      %s44 = int_to_ptr.vmem [resolvable:$true] %s43
      %46 = dma.vmem_to_smem %s44, 32, [#allocation4], [#allocation5]
    $region33: #{gat_forward.2} parent=1 // pred_fallthru
      _
    // Predicated region
    $region34: #{gat_forward.2} parent=1 // pred_check
      _
    $region35: #{gat_forward.2} parent=1 // pred_check_branch
      %48 = sbr.rel (0) target = $region37
    $region36: #{gat_forward.2} parent=1 // pred_region
      %49 = dma.done [#allocation3], 64
    $region37: #{gat_forward.2} parent=1 // pred_fallthru
      _
    // Predicated region
    $region38: #{gat_forward.2} parent=1 // pred_check
      _
    $region39: #{gat_forward.2} parent=1 // pred_check_branch
      %51 = sbr.rel (0) target = $region41
    $region40: #{gat_forward.2} parent=1 // pred_region
      %52 = dma.done [#allocation5], 32
    $region41: #{gat_forward.2} parent=1 // pred_fallthru
      _
    %53 = sfence
    %v54 = vld [vmem:[%s0] sm:$0xff]
    %v55 = vld [vmem:[%s0 + $0x8] sm:$0xff]
    %v56 = vld [vmem:[%s0 + $0x10] sm:$0xff]
    %v57 = vld [vmem:[%s0 + $0x18] sm:$0xff]
    %v58 = vld [vmem:[%s0 + $0x20] sm:$0xff]
    %v59 = vld [vmem:[%s0 + $0x28] sm:$0xff]
    %v60 = vld [vmem:[%s0 + $0x30] sm:$0xff]
    %v61 = vld [vmem:[%s0 + $0x38] sm:$0xff]
    %v62 = vld [vmem:[%s0 + $0x40] sm:$0xff]
    %v63 = vld [vmem:[%s0 + $0x48] sm:$0xff]
    %v64 = vld [vmem:[%s0 + $0x50] sm:$0xff]
    %v65 = vld [vmem:[%s0 + $0x58] sm:$0xff]
    %v66 = vld [vmem:[%s0 + $0x60] sm:$0xff]
    %v67 = vld [vmem:[%s0 + $0x68] sm:$0xff]
    %v68 = vld [vmem:[%s0 + $0x70] sm:$0xff]
    %v69 = vld [vmem:[%s0 + $0x78] sm:$0xff]
    %v70 = vld [vmem:[%s1] sm:$0xff]
    %v71 = vld [vmem:[%s1 + $0x8] sm:$0xff]
    %v72 = vld [vmem:[%s2] sm:$0xff]
    %v73 = vld [vmem:[%s2 + $0x8] sm:$0xff]
    %v74 = vld [vmem:[%s3] sm:$0xf]
    %v75 = vld [vmem:[%s3 + $0x4] sm:$0xf]
    %v76 = vunpack.c.l.bf16 %v74
    %v77 = vunpack.c.l.bf16 %v75
    %v78 = vld [vmem:[%s4] sm:$0xf]
    %v79 = vld [vmem:[%s4 + $0x4] sm:$0xf]
    %v80 = vunpack.c.l.bf16 %v78
    %v81 = vunpack.c.l.bf16 %v79
    %s82 = scalar_lea.vmem %s4, 8
    %v83 = vld [vmem:[%s82] sm:$0xf]
    %v84 = vld [vmem:[%s82 + $0x4] sm:$0xf]
    %v85 = vunpack.c.l.bf16 %v83
    %v86 = vunpack.c.l.bf16 %v84
    %s87 = scalar_lea.vmem %s4, 16
    %v88 = vld [vmem:[%s87] sm:$0xf]
    %v89 = vld [vmem:[%s87 + $0x4] sm:$0xf]
    %v90 = vunpack.c.l.bf16 %v88
    %v91 = vunpack.c.l.bf16 %v89
    %v92 = vlaneseq
    %v93 = vand.u32 %v92, 127
    %s94 = sld [smem:[#allocation2]]
    %v95 = vstv %s94
    %v96 = vmul.f32 %v80, %v95
    %v97 = vmul.f32 %v81, %v95
    %s98 = sld [smem:[#allocation2 + $0x80]]
    %v99 = vstv %s98
    %v100 = vmul.f32 %v85, %v99
    %v101 = vmul.f32 %v86, %v99
    %v102 = vadd.f32 %v96, %v100
    %v103 = vadd.f32 %v97, %v101
    %s104 = sld [smem:[#allocation2 + $0x100]]
    %v105 = vstv %s104
    %v106 = vmul.f32 %v90, %v105
    %v107 = vmul.f32 %v91, %v105
    %v108 = vadd.f32 %v102, %v106
    %v109 = vadd.f32 %v103, %v107
    %111 = vset.pattern.permute.xlu0 0
    %112 = vperm.xlu0 %111, %v72
    %v113 = vpop.permute.xlu0 %112
    %116 = vset.pattern.permute.xlu0 0
    %117 = vperm.xlu0 %116, %v73
    %v118 = vpop.permute.xlu0 %117
    %v120 = vlaneseq
    %v121 = vshrl.u32 %v120, 7
    %v122 = vsub.s32 0, %v121
    %v123 = vrot.slane %v70, %v122
    %v124 = vadd.f32 %v113, %v123
    %v125 = vadd.f32 %v118, %v123
    %v126 = vadd.f32 %v124, %v108
    %v127 = vadd.f32 %v125, %v109
    %vm128 = vcmp.gt.f32.partialorder %v126, 0.0
    %vm129 = vcmp.gt.f32.partialorder %v127, 0.0
    %s130 = sld [smem:[#allocation4]]
    %s131 = sld [smem:[#allocation4 + $0x80]]
    %v132 = vstv %s130
    %v133 = vstv %s131
    %v134 = vsel %vm128, %v132, %v133
    %v135 = vsel %vm129, %v132, %v133
    %v136 = vmul.f32 %v134, %v126
    %v137 = vmul.f32 %v135, %v127
    %v138 = vadd.f32 %v76, %v136
    %v139 = vadd.f32 %v77, %v137
    %s140 = sld [smem:[#allocation2 + $0x1]]
    %v141 = vstv %s140
    %v142 = vmul.f32 %v80, %v141
    %v143 = vmul.f32 %v81, %v141
    %s144 = sld [smem:[#allocation2 + $0x81]]
    %v145 = vstv %s144
    %v146 = vmul.f32 %v85, %v145
    %v147 = vmul.f32 %v86, %v145
    %v148 = vadd.f32 %v142, %v146
    %v149 = vadd.f32 %v143, %v147
    %s150 = sld [smem:[#allocation2 + $0x101]]
    %v151 = vstv %s150
    %v152 = vmul.f32 %v90, %v151
    %v153 = vmul.f32 %v91, %v151
    %v154 = vadd.f32 %v148, %v152
    %v155 = vadd.f32 %v149, %v153
    %156 = vset.pattern.permute.xlu0 1
    %157 = vperm.xlu0 %156, %v72
    %v158 = vpop.permute.xlu0 %157
    %160 = vset.pattern.permute.xlu0 1
    %161 = vperm.xlu0 %160, %v73
    %v162 = vpop.permute.xlu0 %161
    %v164 = vlaneseq
    %v165 = vshrl.u32 %v164, 7
    %v166 = vsub.s32 1, %v165
    %v167 = vrot.slane %v70, %v166
    %v168 = vadd.f32 %v158, %v167
    %v169 = vadd.f32 %v162, %v167
    %v170 = vadd.f32 %v168, %v154
    %v171 = vadd.f32 %v169, %v155
    %vm172 = vcmp.gt.f32.partialorder %v170, 0.0
    %vm173 = vcmp.gt.f32.partialorder %v171, 0.0
    %s174 = sld [smem:[#allocation4 + $0x1]]
    %s175 = sld [smem:[#allocation4 + $0x81]]
    %v176 = vstv %s174
    %v177 = vstv %s175
    %v178 = vsel %vm172, %v176, %v177
    %v179 = vsel %vm173, %v176, %v177
    %v180 = vmul.f32 %v178, %v170
    %v181 = vmul.f32 %v179, %v171
    %v182 = vadd.f32 %v138, %v180
    %v183 = vadd.f32 %v139, %v181
    %s184 = sld [smem:[#allocation2 + $0x2]]
    %v185 = vstv %s184
    %v186 = vmul.f32 %v80, %v185
    %v187 = vmul.f32 %v81, %v185
    %s188 = sld [smem:[#allocation2 + $0x82]]
    %v189 = vstv %s188
    %v190 = vmul.f32 %v85, %v189
    %v191 = vmul.f32 %v86, %v189
    %v192 = vadd.f32 %v186, %v190
    %v193 = vadd.f32 %v187, %v191
    %s194 = sld [smem:[#allocation2 + $0x102]]
    %v195 = vstv %s194
    %v196 = vmul.f32 %v90, %v195
    %v197 = vmul.f32 %v91, %v195
    %v198 = vadd.f32 %v192, %v196
    %v199 = vadd.f32 %v193, %v197
    %200 = vset.pattern.permute.xlu0 2
    %201 = vperm.xlu0 %200, %v72
    %v202 = vpop.permute.xlu0 %201
    %204 = vset.pattern.permute.xlu0 2
    %205 = vperm.xlu0 %204, %v73
    %v206 = vpop.permute.xlu0 %205
    %v208 = vlaneseq
    %v209 = vshrl.u32 %v208, 7
    %v210 = vsub.s32 2, %v209
    %v211 = vrot.slane %v70, %v210
    %v212 = vadd.f32 %v202, %v211
    %v213 = vadd.f32 %v206, %v211
    %v214 = vadd.f32 %v212, %v198
    %v215 = vadd.f32 %v213, %v199
    %vm216 = vcmp.gt.f32.partialorder %v214, 0.0
    %vm217 = vcmp.gt.f32.partialorder %v215, 0.0
    %s218 = sld [smem:[#allocation4 + $0x2]]
    %s219 = sld [smem:[#allocation4 + $0x82]]
    %v220 = vstv %s218
    %v221 = vstv %s219
    %v222 = vsel %vm216, %v220, %v221
    %v223 = vsel %vm217, %v220, %v221
    %v224 = vmul.f32 %v222, %v214
    %v225 = vmul.f32 %v223, %v215
    %v226 = vadd.f32 %v182, %v224
    %v227 = vadd.f32 %v183, %v225
    %s228 = sld [smem:[#allocation2 + $0x3]]
    %v229 = vstv %s228
    %v230 = vmul.f32 %v80, %v229
    %v231 = vmul.f32 %v81, %v229
    %s232 = sld [smem:[#allocation2 + $0x83]]
    %v233 = vstv %s232
    %v234 = vmul.f32 %v85, %v233
    %v235 = vmul.f32 %v86, %v233
    %v236 = vadd.f32 %v230, %v234
    %v237 = vadd.f32 %v231, %v235
    %s238 = sld [smem:[#allocation2 + $0x103]]
    %v239 = vstv %s238
    %v240 = vmul.f32 %v90, %v239
    %v241 = vmul.f32 %v91, %v239
    %v242 = vadd.f32 %v236, %v240
    %v243 = vadd.f32 %v237, %v241
    %244 = vset.pattern.permute.xlu0 3
    %245 = vperm.xlu0 %244, %v72
    %v246 = vpop.permute.xlu0 %245
    %248 = vset.pattern.permute.xlu0 3
    %249 = vperm.xlu0 %248, %v73
    %v250 = vpop.permute.xlu0 %249
    %v252 = vlaneseq
    %v253 = vshrl.u32 %v252, 7
    %v254 = vsub.s32 3, %v253
    %v255 = vrot.slane %v70, %v254
    %v256 = vadd.f32 %v246, %v255
    %v257 = vadd.f32 %v250, %v255
    %v258 = vadd.f32 %v256, %v242
    %v259 = vadd.f32 %v257, %v243
    %vm260 = vcmp.gt.f32.partialorder %v258, 0.0
    %vm261 = vcmp.gt.f32.partialorder %v259, 0.0
    %s262 = sld [smem:[#allocation4 + $0x3]]
    %s263 = sld [smem:[#allocation4 + $0x83]]
    %v264 = vstv %s262
    %v265 = vstv %s263
    %v266 = vsel %vm260, %v264, %v265
    %v267 = vsel %vm261, %v264, %v265
    %v268 = vmul.f32 %v266, %v258
    %v269 = vmul.f32 %v267, %v259
    %v270 = vadd.f32 %v226, %v268
    %v271 = vadd.f32 %v227, %v269
    %s272 = sld [smem:[#allocation2 + $0x4]]
    %v273 = vstv %s272
    %v274 = vmul.f32 %v80, %v273
    %v275 = vmul.f32 %v81, %v273
    %s276 = sld [smem:[#allocation2 + $0x84]]
    %v277 = vstv %s276
    %v278 = vmul.f32 %v85, %v277
    %v279 = vmul.f32 %v86, %v277
    %v280 = vadd.f32 %v274, %v278
    %v281 = vadd.f32 %v275, %v279
    %s282 = sld [smem:[#allocation2 + $0x104]]
    %v283 = vstv %s282
    %v284 = vmul.f32 %v90, %v283
    %v285 = vmul.f32 %v91, %v283
    %v286 = vadd.f32 %v280, %v284
    %v287 = vadd.f32 %v281, %v285
    %288 = vset.pattern.permute.xlu0 4
    %289 = vperm.xlu0 %288, %v72
    %v290 = vpop.permute.xlu0 %289
    %292 = vset.pattern.permute.xlu0 4
    %293 = vperm.xlu0 %292, %v73
    %v294 = vpop.permute.xlu0 %293
    %v296 = vlaneseq
    %v297 = vshrl.u32 %v296, 7
    %v298 = vsub.s32 4, %v297
    %v299 = vrot.slane %v70, %v298
    %v300 = vadd.f32 %v290, %v299
    %v301 = vadd.f32 %v294, %v299
    %v302 = vadd.f32 %v300, %v286
    %v303 = vadd.f32 %v301, %v287
    %vm304 = vcmp.gt.f32.partialorder %v302, 0.0
    %vm305 = vcmp.gt.f32.partialorder %v303, 0.0
    %s306 = sld [smem:[#allocation4 + $0x4]]
    %s307 = sld [smem:[#allocation4 + $0x84]]
    %v308 = vstv %s306
    %v309 = vstv %s307
    %v310 = vsel %vm304, %v308, %v309
    %v311 = vsel %vm305, %v308, %v309
    %v312 = vmul.f32 %v310, %v302
    %v313 = vmul.f32 %v311, %v303
    %v314 = vadd.f32 %v270, %v312
    %v315 = vadd.f32 %v271, %v313
    %s316 = sld [smem:[#allocation2 + $0x5]]
    %v317 = vstv %s316
    %v318 = vmul.f32 %v80, %v317
    %v319 = vmul.f32 %v81, %v317
    %s320 = sld [smem:[#allocation2 + $0x85]]
    %v321 = vstv %s320
    %v322 = vmul.f32 %v85, %v321
    %v323 = vmul.f32 %v86, %v321
    %v324 = vadd.f32 %v318, %v322
    %v325 = vadd.f32 %v319, %v323
    %s326 = sld [smem:[#allocation2 + $0x105]]
    %v327 = vstv %s326
    %v328 = vmul.f32 %v90, %v327
    %v329 = vmul.f32 %v91, %v327
    %v330 = vadd.f32 %v324, %v328
    %v331 = vadd.f32 %v325, %v329
    %332 = vset.pattern.permute.xlu0 5
    %333 = vperm.xlu0 %332, %v72
    %v334 = vpop.permute.xlu0 %333
    %336 = vset.pattern.permute.xlu0 5
    %337 = vperm.xlu0 %336, %v73
    %v338 = vpop.permute.xlu0 %337
    %v340 = vlaneseq
    %v341 = vshrl.u32 %v340, 7
    %v342 = vsub.s32 5, %v341
    %v343 = vrot.slane %v70, %v342
    %v344 = vadd.f32 %v334, %v343
    %v345 = vadd.f32 %v338, %v343
    %v346 = vadd.f32 %v344, %v330
    %v347 = vadd.f32 %v345, %v331
    %vm348 = vcmp.gt.f32.partialorder %v346, 0.0
    %vm349 = vcmp.gt.f32.partialorder %v347, 0.0
    %s350 = sld [smem:[#allocation4 + $0x5]]
    %s351 = sld [smem:[#allocation4 + $0x85]]
    %v352 = vstv %s350
    %v353 = vstv %s351
    %v354 = vsel %vm348, %v352, %v353
    %v355 = vsel %vm349, %v352, %v353
    %v356 = vmul.f32 %v354, %v346
    %v357 = vmul.f32 %v355, %v347
    %v358 = vadd.f32 %v314, %v356
    %v359 = vadd.f32 %v315, %v357
    %s360 = sld [smem:[#allocation2 + $0x6]]
    %v361 = vstv %s360
    %v362 = vmul.f32 %v80, %v361
    %v363 = vmul.f32 %v81, %v361
    %s364 = sld [smem:[#allocation2 + $0x86]]
    %v365 = vstv %s364
    %v366 = vmul.f32 %v85, %v365
    %v367 = vmul.f32 %v86, %v365
    %v368 = vadd.f32 %v362, %v366
    %v369 = vadd.f32 %v363, %v367
    %s370 = sld [smem:[#allocation2 + $0x106]]
    %v371 = vstv %s370
    %v372 = vmul.f32 %v90, %v371
    %v373 = vmul.f32 %v91, %v371
    %v374 = vadd.f32 %v368, %v372
    %v375 = vadd.f32 %v369, %v373
    %376 = vset.pattern.permute.xlu0 6
    %377 = vperm.xlu0 %376, %v72
    %v378 = vpop.permute.xlu0 %377
    %380 = vset.pattern.permute.xlu0 6
    %381 = vperm.xlu0 %380, %v73
    %v382 = vpop.permute.xlu0 %381
    %v384 = vlaneseq
    %v385 = vshrl.u32 %v384, 7
    %v386 = vsub.s32 6, %v385
    %v387 = vrot.slane %v70, %v386
    %v388 = vadd.f32 %v378, %v387
    %v389 = vadd.f32 %v382, %v387
    %v390 = vadd.f32 %v388, %v374
    %v391 = vadd.f32 %v389, %v375
    %vm392 = vcmp.gt.f32.partialorder %v390, 0.0
    %vm393 = vcmp.gt.f32.partialorder %v391, 0.0
    %s394 = sld [smem:[#allocation4 + $0x6]]
    %s395 = sld [smem:[#allocation4 + $0x86]]
    %v396 = vstv %s394
    %v397 = vstv %s395
    %v398 = vsel %vm392, %v396, %v397
    %v399 = vsel %vm393, %v396, %v397
    %v400 = vmul.f32 %v398, %v390
    %v401 = vmul.f32 %v399, %v391
    %v402 = vadd.f32 %v358, %v400
    %v403 = vadd.f32 %v359, %v401
    %s404 = sld [smem:[#allocation2 + $0x7]]
    %v405 = vstv %s404
    %v406 = vmul.f32 %v80, %v405
    %v407 = vmul.f32 %v81, %v405
    %s408 = sld [smem:[#allocation2 + $0x87]]
    %v409 = vstv %s408
    %v410 = vmul.f32 %v85, %v409
    %v411 = vmul.f32 %v86, %v409
    %v412 = vadd.f32 %v406, %v410
    %v413 = vadd.f32 %v407, %v411
    %s414 = sld [smem:[#allocation2 + $0x107]]
    %v415 = vstv %s414
    %v416 = vmul.f32 %v90, %v415
    %v417 = vmul.f32 %v91, %v415
    %v418 = vadd.f32 %v412, %v416
    %v419 = vadd.f32 %v413, %v417
    %420 = vset.pattern.permute.xlu0 7
    %421 = vperm.xlu0 %420, %v72
    %v422 = vpop.permute.xlu0 %421
    %424 = vset.pattern.permute.xlu0 7
    %425 = vperm.xlu0 %424, %v73
    %v426 = vpop.permute.xlu0 %425
    %v428 = vlaneseq
    %v429 = vshrl.u32 %v428, 7
    %v430 = vsub.s32 7, %v429
    %v431 = vrot.slane %v70, %v430
    %v432 = vadd.f32 %v422, %v431
    %v433 = vadd.f32 %v426, %v431
    %v434 = vadd.f32 %v432, %v418
    %v435 = vadd.f32 %v433, %v419
    %vm436 = vcmp.gt.f32.partialorder %v434, 0.0
    %vm437 = vcmp.gt.f32.partialorder %v435, 0.0
    %s438 = sld [smem:[#allocation4 + $0x7]]
    %s439 = sld [smem:[#allocation4 + $0x87]]
    %v440 = vstv %s438
    %v441 = vstv %s439
    %v442 = vsel %vm436, %v440, %v441
    %v443 = vsel %vm437, %v440, %v441
    %v444 = vmul.f32 %v442, %v434
    %v445 = vmul.f32 %v443, %v435
    %v446 = vadd.f32 %v402, %v444
    %v447 = vadd.f32 %v403, %v445
    %448 = vmax.xlane.f32.xlu0 %v446
    %v449 = vpop.xlane.xlu0 %448
    %450 = vmax.xlane.f32.xlu0 %v447
    %v451 = vpop.xlane.xlu0 %450
    %v452 = vsub.f32 %v446, %v449
    %v453 = vsub.f32 %v447, %v451
    %v454 = vmul.f32 %v452, 1.442695
    %v455 = vpow.pop %v454
    %v456 = vmul.f32 %v453, 1.442695
    %v457 = vpow.pop %v456
    %458 = vadd.xlane.f32.xlu0 %v455
    %v459 = vpop.xlane.xlu0 %458
    %460 = vadd.xlane.f32.xlu0 %v457
    %v461 = vpop.xlane.xlu0 %460
    %v462 = vrcp.pop %v459
    %v463 = vrcp.pop %v461
    %v464 = vmul.f32 %v455, %v462
    %v465 = vmul.f32 %v457, %v463
    %466 = vmatprep.subr.mxu0 0.0
    %467 = vmatpush1.msra.mxu0 %v54
    %468 = vmatprep.subr.mxu0 0.0
    %469 = vmatpush1.msra.mxu0 %v55
    %470 = vmatprep.subr.mxu0 0.0
    %471 = vmatpush1.msra.mxu0 %v56
    %472 = vmatprep.subr.mxu0 0.0
    %473 = vmatpush1.msra.mxu0 %v57
    %474 = vmatprep.subr.mxu0 0.0
    %475 = vmatpush1.msra.mxu0 %v58
    %476 = vmatprep.subr.mxu0 0.0
    %477 = vmatpush1.msra.mxu0 %v59
    %478 = vmatprep.subr.mxu0 0.0
    %479 = vmatpush1.msra.mxu0 %v60
    %480 = vmatprep.subr.mxu0 0.0
    %481 = vmatpush1.msra.mxu0 %v61
    %482 = vmatprep.subr.mxu0 0.0
    %483 = vmatpush1.msra.mxu0 %v62
    %484 = vmatprep.subr.mxu0 0.0
    %485 = vmatpush1.msra.mxu0 %v63
    %486 = vmatprep.subr.mxu0 0.0
    %487 = vmatpush1.msra.mxu0 %v64
    %488 = vmatprep.subr.mxu0 0.0
    %489 = vmatpush1.msra.mxu0 %v65
    %490 = vmatprep.subr.mxu0 0.0
    %491 = vmatpush1.msra.mxu0 %v66
    %492 = vmatprep.subr.mxu0 0.0
    %493 = vmatpush1.msra.mxu0 %v67
    %494 = vmatprep.subr.mxu0 0.0
    %495 = vmatpush1.msra.mxu0 %v68
    %496 = vmatprep.subr.mxu0 0.0
    %497 = vmatpush1.msra.mxu0 %v69
    %498 = vmatprep.subr.mxu0 0.0
    %499 = vmatpush1.msra.mxu0 0.0
    %500 = vmatprep.subr.mxu0 0.0
    %501 = vmatpush1.msra.mxu0 0.0
    %502 = vmatprep.subr.mxu0 0.0
    %503 = vmatpush1.msra.mxu0 0.0
    %504 = vmatprep.subr.mxu0 0.0
    %505 = vmatpush1.msra.mxu0 0.0
    %506 = vmatprep.subr.mxu0 0.0
    %507 = vmatpush1.msra.mxu0 0.0
    %508 = vmatprep.subr.mxu0 0.0
    %509 = vmatpush1.msra.mxu0 0.0
    %510 = vmatprep.subr.mxu0 0.0
    %511 = vmatpush1.msra.mxu0 0.0
    %512 = vmatprep.subr.mxu0 0.0
    %513 = vmatpush1.msra.mxu0 0.0
    %514 = vmatprep.subr.mxu0 0.0
    %515 = vmatpush1.msra.mxu0 0.0
    %516 = vmatprep.subr.mxu0 0.0
    %517 = vmatpush1.msra.mxu0 0.0
    %518 = vmatprep.subr.mxu0 0.0
    %519 = vmatpush1.msra.mxu0 0.0
    %520 = vmatprep.subr.mxu0 0.0
    %521 = vmatpush1.msra.mxu0 0.0
    %522 = vmatprep.subr.mxu0 0.0
    %523 = vmatpush1.msra.mxu0 0.0
    %524 = vmatprep.subr.mxu0 0.0
    %525 = vmatpush1.msra.mxu0 0.0
    %526 = vmatprep.subr.mxu0 0.0
    %527 = vmatpush1.msra.mxu0 0.0
    %528 = vmatprep.subr.mxu0 0.0
    %529 = vmatpush1.msra.mxu0 0.0
    %530 = vmatprep.mubr.f32.mxu0 0.0
    %531 = vmatmul.mubr.f32.gmra.mrb[0].mxu0 %v464
    %v532 = vpop.f32.mrb[0].mxu0
    %v533 = vadd.f32 0.0, %v532
    %v534 = vpop.f32.mrb[0].mxu0
    %535 = vmatprep.mubr.f32.mxu0 0.0
    %536 = vmatmul.mubr.f32.gmra.mrb[0].mxu0 %v465
    %v537 = vpop.f32.mrb[0].mxu0
    %v538 = vadd.f32 0.0, %v537
    %v539 = vpop.f32.mrb[0].mxu0
    %540 = vdwg.mxu0
    %vm541 = vcmp.ge.s32.totalorder %v93, 0
    %vm542 = vcmp.lt.s32.totalorder %v93, 8
    %vm543 = vmand %vm541, %vm542
    %v544 = vsel %vm543, 1, 0
    %vm545 = vcmp.eq.s32.totalorder %v544, 1
    %v546 = vsel %vm545, %v533, 0.0
    %v547 = vsel %vm545, %v538, 0.0
    %v548 = vadd.f32 %v546, 0.0
    %v549 = vadd.f32 %v547, 0.0
    %s550 = sld [smem:[#allocation2 + $0x8]]
    %v551 = vstv %s550
    %v552 = vmul.f32 %v80, %v551
    %v553 = vmul.f32 %v81, %v551
    %s554 = sld [smem:[#allocation2 + $0x88]]
    %v555 = vstv %s554
    %v556 = vmul.f32 %v85, %v555
    %v557 = vmul.f32 %v86, %v555
    %v558 = vadd.f32 %v552, %v556
    %v559 = vadd.f32 %v553, %v557
    %s560 = sld [smem:[#allocation2 + $0x108]]
    %v561 = vstv %s560
    %v562 = vmul.f32 %v90, %v561
    %v563 = vmul.f32 %v91, %v561
    %v564 = vadd.f32 %v558, %v562
    %v565 = vadd.f32 %v559, %v563
    %566 = vset.pattern.permute.xlu0 8
    %567 = vperm.xlu0 %566, %v72
    %v568 = vpop.permute.xlu0 %567
    %570 = vset.pattern.permute.xlu0 8
    %571 = vperm.xlu0 %570, %v73
    %v572 = vpop.permute.xlu0 %571
    %v574 = vlaneseq
    %v575 = vshrl.u32 %v574, 7
    %v576 = vsub.s32 0, %v575
    %v577 = vrot.slane %v71, %v576
    %v578 = vadd.f32 %v568, %v577
    %v579 = vadd.f32 %v572, %v577
    %v580 = vadd.f32 %v578, %v564
    %v581 = vadd.f32 %v579, %v565
    %vm582 = vcmp.gt.f32.partialorder %v580, 0.0
    %vm583 = vcmp.gt.f32.partialorder %v581, 0.0
    %s584 = sld [smem:[#allocation4 + $0x8]]
    %s585 = sld [smem:[#allocation4 + $0x88]]
    %v586 = vstv %s584
    %v587 = vstv %s585
    %v588 = vsel %vm582, %v586, %v587
    %v589 = vsel %vm583, %v586, %v587
    %v590 = vmul.f32 %v588, %v580
    %v591 = vmul.f32 %v589, %v581
    %v592 = vadd.f32 %v76, %v590
    %v593 = vadd.f32 %v77, %v591
    %s594 = sld [smem:[#allocation2 + $0x9]]
    %v595 = vstv %s594
    %v596 = vmul.f32 %v80, %v595
    %v597 = vmul.f32 %v81, %v595
    %s598 = sld [smem:[#allocation2 + $0x89]]
    %v599 = vstv %s598
    %v600 = vmul.f32 %v85, %v599
    %v601 = vmul.f32 %v86, %v599
    %v602 = vadd.f32 %v596, %v600
    %v603 = vadd.f32 %v597, %v601
    %s604 = sld [smem:[#allocation2 + $0x109]]
    %v605 = vstv %s604
    %v606 = vmul.f32 %v90, %v605
    %v607 = vmul.f32 %v91, %v605
    %v608 = vadd.f32 %v602, %v606
    %v609 = vadd.f32 %v603, %v607
    %610 = vset.pattern.permute.xlu0 9
    %611 = vperm.xlu0 %610, %v72
    %v612 = vpop.permute.xlu0 %611
    %614 = vset.pattern.permute.xlu0 9
    %615 = vperm.xlu0 %614, %v73
    %v616 = vpop.permute.xlu0 %615
    %v618 = vlaneseq
    %v619 = vshrl.u32 %v618, 7
    %v620 = vsub.s32 1, %v619
    %v621 = vrot.slane %v71, %v620
    %v622 = vadd.f32 %v612, %v621
    %v623 = vadd.f32 %v616, %v621
    %v624 = vadd.f32 %v622, %v608
    %v625 = vadd.f32 %v623, %v609
    %vm626 = vcmp.gt.f32.partialorder %v624, 0.0
    %vm627 = vcmp.gt.f32.partialorder %v625, 0.0
    %s628 = sld [smem:[#allocation4 + $0x9]]
    %s629 = sld [smem:[#allocation4 + $0x89]]
    %v630 = vstv %s628
    %v631 = vstv %s629
    %v632 = vsel %vm626, %v630, %v631
    %v633 = vsel %vm627, %v630, %v631
    %v634 = vmul.f32 %v632, %v624
    %v635 = vmul.f32 %v633, %v625
    %v636 = vadd.f32 %v592, %v634
    %v637 = vadd.f32 %v593, %v635
    %s638 = sld [smem:[#allocation2 + $0xa]]
    %v639 = vstv %s638
    %v640 = vmul.f32 %v80, %v639
    %v641 = vmul.f32 %v81, %v639
    %s642 = sld [smem:[#allocation2 + $0x8a]]
    %v643 = vstv %s642
    %v644 = vmul.f32 %v85, %v643
    %v645 = vmul.f32 %v86, %v643
    %v646 = vadd.f32 %v640, %v644
    %v647 = vadd.f32 %v641, %v645
    %s648 = sld [smem:[#allocation2 + $0x10a]]
    %v649 = vstv %s648
    %v650 = vmul.f32 %v90, %v649
    %v651 = vmul.f32 %v91, %v649
    %v652 = vadd.f32 %v646, %v650
    %v653 = vadd.f32 %v647, %v651
    %654 = vset.pattern.permute.xlu0 10
    %655 = vperm.xlu0 %654, %v72
    %v656 = vpop.permute.xlu0 %655
    %658 = vset.pattern.permute.xlu0 10
    %659 = vperm.xlu0 %658, %v73
    %v660 = vpop.permute.xlu0 %659
    %v662 = vlaneseq
    %v663 = vshrl.u32 %v662, 7
    %v664 = vsub.s32 2, %v663
    %v665 = vrot.slane %v71, %v664
    %v666 = vadd.f32 %v656, %v665
    %v667 = vadd.f32 %v660, %v665
    %v668 = vadd.f32 %v666, %v652
    %v669 = vadd.f32 %v667, %v653
    %vm670 = vcmp.gt.f32.partialorder %v668, 0.0
    %vm671 = vcmp.gt.f32.partialorder %v669, 0.0
    %s672 = sld [smem:[#allocation4 + $0xa]]
    %s673 = sld [smem:[#allocation4 + $0x8a]]
    %v674 = vstv %s672
    %v675 = vstv %s673
    %v676 = vsel %vm670, %v674, %v675
    %v677 = vsel %vm671, %v674, %v675
    %v678 = vmul.f32 %v676, %v668
    %v679 = vmul.f32 %v677, %v669
    %v680 = vadd.f32 %v636, %v678
    %v681 = vadd.f32 %v637, %v679
    %s682 = sld [smem:[#allocation2 + $0xb]]
    %v683 = vstv %s682
    %v684 = vmul.f32 %v80, %v683
    %v685 = vmul.f32 %v81, %v683
    %s686 = sld [smem:[#allocation2 + $0x8b]]
    %v687 = vstv %s686
    %v688 = vmul.f32 %v85, %v687
    %v689 = vmul.f32 %v86, %v687
    %v690 = vadd.f32 %v684, %v688
    %v691 = vadd.f32 %v685, %v689
    %s692 = sld [smem:[#allocation2 + $0x10b]]
    %v693 = vstv %s692
    %v694 = vmul.f32 %v90, %v693
    %v695 = vmul.f32 %v91, %v693
    %v696 = vadd.f32 %v690, %v694
    %v697 = vadd.f32 %v691, %v695
    %698 = vset.pattern.permute.xlu0 11
    %699 = vperm.xlu0 %698, %v72
    %v700 = vpop.permute.xlu0 %699
    %702 = vset.pattern.permute.xlu0 11
    %703 = vperm.xlu0 %702, %v73
    %v704 = vpop.permute.xlu0 %703
    %v706 = vlaneseq
    %v707 = vshrl.u32 %v706, 7
    %v708 = vsub.s32 3, %v707
    %v709 = vrot.slane %v71, %v708
    %v710 = vadd.f32 %v700, %v709
    %v711 = vadd.f32 %v704, %v709
    %v712 = vadd.f32 %v710, %v696
    %v713 = vadd.f32 %v711, %v697
    %vm714 = vcmp.gt.f32.partialorder %v712, 0.0
    %vm715 = vcmp.gt.f32.partialorder %v713, 0.0
    %s716 = sld [smem:[#allocation4 + $0xb]]
    %s717 = sld [smem:[#allocation4 + $0x8b]]
    %v718 = vstv %s716
    %v719 = vstv %s717
    %v720 = vsel %vm714, %v718, %v719
    %v721 = vsel %vm715, %v718, %v719
    %v722 = vmul.f32 %v720, %v712
    %v723 = vmul.f32 %v721, %v713
    %v724 = vadd.f32 %v680, %v722
    %v725 = vadd.f32 %v681, %v723
    %s726 = sld [smem:[#allocation2 + $0xc]]
    %v727 = vstv %s726
    %v728 = vmul.f32 %v80, %v727
    %v729 = vmul.f32 %v81, %v727
    %s730 = sld [smem:[#allocation2 + $0x8c]]
    %v731 = vstv %s730
    %v732 = vmul.f32 %v85, %v731
    %v733 = vmul.f32 %v86, %v731
    %v734 = vadd.f32 %v728, %v732
    %v735 = vadd.f32 %v729, %v733
    %s736 = sld [smem:[#allocation2 + $0x10c]]
    %v737 = vstv %s736
    %v738 = vmul.f32 %v90, %v737
    %v739 = vmul.f32 %v91, %v737
    %v740 = vadd.f32 %v734, %v738
    %v741 = vadd.f32 %v735, %v739
    %742 = vset.pattern.permute.xlu0 12
    %743 = vperm.xlu0 %742, %v72
    %v744 = vpop.permute.xlu0 %743
    %746 = vset.pattern.permute.xlu0 12
    %747 = vperm.xlu0 %746, %v73
    %v748 = vpop.permute.xlu0 %747
    %v750 = vlaneseq
    %v751 = vshrl.u32 %v750, 7
    %v752 = vsub.s32 4, %v751
    %v753 = vrot.slane %v71, %v752
    %v754 = vadd.f32 %v744, %v753
    %v755 = vadd.f32 %v748, %v753
    %v756 = vadd.f32 %v754, %v740
    %v757 = vadd.f32 %v755, %v741
    %vm758 = vcmp.gt.f32.partialorder %v756, 0.0
    %vm759 = vcmp.gt.f32.partialorder %v757, 0.0
    %s760 = sld [smem:[#allocation4 + $0xc]]
    %s761 = sld [smem:[#allocation4 + $0x8c]]
    %v762 = vstv %s760
    %v763 = vstv %s761
    %v764 = vsel %vm758, %v762, %v763
    %v765 = vsel %vm759, %v762, %v763
    %v766 = vmul.f32 %v764, %v756
    %v767 = vmul.f32 %v765, %v757
    %v768 = vadd.f32 %v724, %v766
    %v769 = vadd.f32 %v725, %v767
    %s770 = sld [smem:[#allocation2 + $0xd]]
    %v771 = vstv %s770
    %v772 = vmul.f32 %v80, %v771
    %v773 = vmul.f32 %v81, %v771
    %s774 = sld [smem:[#allocation2 + $0x8d]]
    %v775 = vstv %s774
    %v776 = vmul.f32 %v85, %v775
    %v777 = vmul.f32 %v86, %v775
    %v778 = vadd.f32 %v772, %v776
    %v779 = vadd.f32 %v773, %v777
    %s780 = sld [smem:[#allocation2 + $0x10d]]
    %v781 = vstv %s780
    %v782 = vmul.f32 %v90, %v781
    %v783 = vmul.f32 %v91, %v781
    %v784 = vadd.f32 %v778, %v782
    %v785 = vadd.f32 %v779, %v783
    %786 = vset.pattern.permute.xlu0 13
    %787 = vperm.xlu0 %786, %v72
    %v788 = vpop.permute.xlu0 %787
    %790 = vset.pattern.permute.xlu0 13
    %791 = vperm.xlu0 %790, %v73
    %v792 = vpop.permute.xlu0 %791
    %v794 = vlaneseq
    %v795 = vshrl.u32 %v794, 7
    %v796 = vsub.s32 5, %v795
    %v797 = vrot.slane %v71, %v796
    %v798 = vadd.f32 %v788, %v797
    %v799 = vadd.f32 %v792, %v797
    %v800 = vadd.f32 %v798, %v784
    %v801 = vadd.f32 %v799, %v785
    %vm802 = vcmp.gt.f32.partialorder %v800, 0.0
    %vm803 = vcmp.gt.f32.partialorder %v801, 0.0
    %s804 = sld [smem:[#allocation4 + $0xd]]
    %s805 = sld [smem:[#allocation4 + $0x8d]]
    %v806 = vstv %s804
    %v807 = vstv %s805
    %v808 = vsel %vm802, %v806, %v807
    %v809 = vsel %vm803, %v806, %v807
    %v810 = vmul.f32 %v808, %v800
    %v811 = vmul.f32 %v809, %v801
    %v812 = vadd.f32 %v768, %v810
    %v813 = vadd.f32 %v769, %v811
    %s814 = sld [smem:[#allocation2 + $0xe]]
    %v815 = vstv %s814
    %v816 = vmul.f32 %v80, %v815
    %v817 = vmul.f32 %v81, %v815
    %s818 = sld [smem:[#allocation2 + $0x8e]]
    %v819 = vstv %s818
    %v820 = vmul.f32 %v85, %v819
    %v821 = vmul.f32 %v86, %v819
    %v822 = vadd.f32 %v816, %v820
    %v823 = vadd.f32 %v817, %v821
    %s824 = sld [smem:[#allocation2 + $0x10e]]
    %v825 = vstv %s824
    %v826 = vmul.f32 %v90, %v825
    %v827 = vmul.f32 %v91, %v825
    %v828 = vadd.f32 %v822, %v826
    %v829 = vadd.f32 %v823, %v827
    %830 = vset.pattern.permute.xlu0 14
    %831 = vperm.xlu0 %830, %v72
    %v832 = vpop.permute.xlu0 %831
    %834 = vset.pattern.permute.xlu0 14
    %835 = vperm.xlu0 %834, %v73
    %v836 = vpop.permute.xlu0 %835
    %v838 = vlaneseq
    %v839 = vshrl.u32 %v838, 7
    %v840 = vsub.s32 6, %v839
    %v841 = vrot.slane %v71, %v840
    %v842 = vadd.f32 %v832, %v841
    %v843 = vadd.f32 %v836, %v841
    %v844 = vadd.f32 %v842, %v828
    %v845 = vadd.f32 %v843, %v829
    %vm846 = vcmp.gt.f32.partialorder %v844, 0.0
    %vm847 = vcmp.gt.f32.partialorder %v845, 0.0
    %s848 = sld [smem:[#allocation4 + $0xe]]
    %s849 = sld [smem:[#allocation4 + $0x8e]]
    %v850 = vstv %s848
    %v851 = vstv %s849
    %v852 = vsel %vm846, %v850, %v851
    %v853 = vsel %vm847, %v850, %v851
    %v854 = vmul.f32 %v852, %v844
    %v855 = vmul.f32 %v853, %v845
    %v856 = vadd.f32 %v812, %v854
    %v857 = vadd.f32 %v813, %v855
    %s858 = sld [smem:[#allocation2 + $0xf]]
    %v859 = vstv %s858
    %v860 = vmul.f32 %v80, %v859
    %v861 = vmul.f32 %v81, %v859
    %s862 = sld [smem:[#allocation2 + $0x8f]]
    %v863 = vstv %s862
    %v864 = vmul.f32 %v85, %v863
    %v865 = vmul.f32 %v86, %v863
    %v866 = vadd.f32 %v860, %v864
    %v867 = vadd.f32 %v861, %v865
    %s868 = sld [smem:[#allocation2 + $0x10f]]
    %v869 = vstv %s868
    %v870 = vmul.f32 %v90, %v869
    %v871 = vmul.f32 %v91, %v869
    %v872 = vadd.f32 %v866, %v870
    %v873 = vadd.f32 %v867, %v871
    %874 = vset.pattern.permute.xlu0 15
    %875 = vperm.xlu0 %874, %v72
    %v876 = vpop.permute.xlu0 %875
    %878 = vset.pattern.permute.xlu0 15
    %879 = vperm.xlu0 %878, %v73
    %v880 = vpop.permute.xlu0 %879
    %v882 = vlaneseq
    %v883 = vshrl.u32 %v882, 7
    %v884 = vsub.s32 7, %v883
    %v885 = vrot.slane %v71, %v884
    %v886 = vadd.f32 %v876, %v885
    %v887 = vadd.f32 %v880, %v885
    %v888 = vadd.f32 %v886, %v872
    %v889 = vadd.f32 %v887, %v873
    %vm890 = vcmp.gt.f32.partialorder %v888, 0.0
    %vm891 = vcmp.gt.f32.partialorder %v889, 0.0
    %s892 = sld [smem:[#allocation4 + $0xf]]
    %s893 = sld [smem:[#allocation4 + $0x8f]]
    %v894 = vstv %s892
    %v895 = vstv %s893
    %v896 = vsel %vm890, %v894, %v895
    %v897 = vsel %vm891, %v894, %v895
    %v898 = vmul.f32 %v896, %v888
    %v899 = vmul.f32 %v897, %v889
    %v900 = vadd.f32 %v856, %v898
    %v901 = vadd.f32 %v857, %v899
    %902 = vmax.xlane.f32.xlu0 %v900
    %v903 = vpop.xlane.xlu0 %902
    %904 = vmax.xlane.f32.xlu0 %v901
    %v905 = vpop.xlane.xlu0 %904
    %v906 = vsub.f32 %v900, %v903
    %v907 = vsub.f32 %v901, %v905
    %v908 = vmul.f32 %v906, 1.442695
    %v909 = vpow.pop %v908
    %v910 = vmul.f32 %v907, 1.442695
    %v911 = vpow.pop %v910
    %912 = vadd.xlane.f32.xlu0 %v909
    %v913 = vpop.xlane.xlu0 %912
    %914 = vadd.xlane.f32.xlu0 %v911
    %v915 = vpop.xlane.xlu0 %914
    %v916 = vrcp.pop %v913
    %v917 = vrcp.pop %v915
    %v918 = vmul.f32 %v909, %v916
    %v919 = vmul.f32 %v911, %v917
    %920 = vmatprep.subr.mxu0 0.0
    %921 = vmatpush1.msra.mxu0 %v54
    %922 = vmatprep.subr.mxu0 0.0
    %923 = vmatpush1.msra.mxu0 %v55
    %924 = vmatprep.subr.mxu0 0.0
    %925 = vmatpush1.msra.mxu0 %v56
    %926 = vmatprep.subr.mxu0 0.0
    %927 = vmatpush1.msra.mxu0 %v57
    %928 = vmatprep.subr.mxu0 0.0
    %929 = vmatpush1.msra.mxu0 %v58
    %930 = vmatprep.subr.mxu0 0.0
    %931 = vmatpush1.msra.mxu0 %v59
    %932 = vmatprep.subr.mxu0 0.0
    %933 = vmatpush1.msra.mxu0 %v60
    %934 = vmatprep.subr.mxu0 0.0
    %935 = vmatpush1.msra.mxu0 %v61
    %936 = vmatprep.subr.mxu0 0.0
    %937 = vmatpush1.msra.mxu0 %v62
    %938 = vmatprep.subr.mxu0 0.0
    %939 = vmatpush1.msra.mxu0 %v63
    %940 = vmatprep.subr.mxu0 0.0
    %941 = vmatpush1.msra.mxu0 %v64
    %942 = vmatprep.subr.mxu0 0.0
    %943 = vmatpush1.msra.mxu0 %v65
    %944 = vmatprep.subr.mxu0 0.0
    %945 = vmatpush1.msra.mxu0 %v66
    %946 = vmatprep.subr.mxu0 0.0
    %947 = vmatpush1.msra.mxu0 %v67
    %948 = vmatprep.subr.mxu0 0.0
    %949 = vmatpush1.msra.mxu0 %v68
    %950 = vmatprep.subr.mxu0 0.0
    %951 = vmatpush1.msra.mxu0 %v69
    %952 = vmatprep.subr.mxu0 0.0
    %953 = vmatpush1.msra.mxu0 0.0
    %954 = vmatprep.subr.mxu0 0.0
    %955 = vmatpush1.msra.mxu0 0.0
    %956 = vmatprep.subr.mxu0 0.0
    %957 = vmatpush1.msra.mxu0 0.0
    %958 = vmatprep.subr.mxu0 0.0
    %959 = vmatpush1.msra.mxu0 0.0
    %960 = vmatprep.subr.mxu0 0.0
    %961 = vmatpush1.msra.mxu0 0.0
    %962 = vmatprep.subr.mxu0 0.0
    %963 = vmatpush1.msra.mxu0 0.0
    %964 = vmatprep.subr.mxu0 0.0
    %965 = vmatpush1.msra.mxu0 0.0
    %966 = vmatprep.subr.mxu0 0.0
    %967 = vmatpush1.msra.mxu0 0.0
    %968 = vmatprep.subr.mxu0 0.0
    %969 = vmatpush1.msra.mxu0 0.0
    %970 = vmatprep.subr.mxu0 0.0
    %971 = vmatpush1.msra.mxu0 0.0
    %972 = vmatprep.subr.mxu0 0.0
    %973 = vmatpush1.msra.mxu0 0.0
    %974 = vmatprep.subr.mxu0 0.0
    %975 = vmatpush1.msra.mxu0 0.0
    %976 = vmatprep.subr.mxu0 0.0
    %977 = vmatpush1.msra.mxu0 0.0
    %978 = vmatprep.subr.mxu0 0.0
    %979 = vmatpush1.msra.mxu0 0.0
    %980 = vmatprep.subr.mxu0 0.0
    %981 = vmatpush1.msra.mxu0 0.0
    %982 = vmatprep.subr.mxu0 0.0
    %983 = vmatpush1.msra.mxu0 0.0
    %984 = vmatprep.mubr.f32.mxu0 0.0
    %985 = vmatmul.mubr.f32.gmra.mrb[0].mxu0 %v918
    %v986 = vpop.f32.mrb[0].mxu0
    %v987 = vadd.f32 0.0, %v986
    %v988 = vpop.f32.mrb[0].mxu0
    %989 = vmatprep.mubr.f32.mxu0 0.0
    %990 = vmatmul.mubr.f32.gmra.mrb[0].mxu0 %v919
    %v991 = vpop.f32.mrb[0].mxu0
    %v992 = vadd.f32 0.0, %v991
    %v993 = vpop.f32.mrb[0].mxu0
    %994 = vdwg.mxu0
    %vm995 = vcmp.ge.s32.totalorder %v93, 8
    %vm996 = vcmp.lt.s32.totalorder %v93, 16
    %vm997 = vmand %vm995, %vm996
    %v998 = vsel %vm997, 1, 0
    %vm999 = vcmp.eq.s32.totalorder %v998, 1
    %v1000 = vsel %vm999, %v987, 0.0
    %v1001 = vsel %vm999, %v992, 0.0
    %v1002 = vadd.f32 %v548, %v1000
    %v1003 = vadd.f32 %v549, %v1001
    %vm1004 = vcmask 130048
    %v1005 = vsel %vm1004, %v1002, 0.0
    %v1006 = vsel %vm1004, %v1003, 0.0
    %v1007 = vld [vmem:[%s5] sm:$0x1]
    %v1009 = vlaneseq
    %v1010 = vshrl.u32 %v1009, 7
    %v1011 = vsub.s32 0, %v1010
    %v1012 = vrot.slane %v1007, %v1011
    %v1014 = vadd.f32 %v1005, %v1012
    %v1015 = vadd.f32 %v1006, %v1012
    %1016 = vst [vmem:[%s8] sm:$0xff] %v1014
    %1017 = vst [vmem:[%s8 + $0x8] sm:$0xff] %v1015
    // Predicated region
    $region42: #{gat_forward.2} parent=1 // pred_check
      _
    $region43: #{gat_forward.2} parent=1 // pred_check_branch
      %1019 = sbr.rel (0) target = $region45
    $region44: #{gat_forward.2} parent=1 // pred_region
      _
    $region45: #{gat_forward.2} parent=1 // pred_fallthru
      _
    // Predicated region
    $region46: #{gat_forward.2} parent=1 // pred_check
      _
    $region47: #{gat_forward.2} parent=1 // pred_check_branch
      %1021 = sbr.rel (0) target = $region49
    $region48: #{gat_forward.2} parent=1 // pred_region
      _
    $region49: #{gat_forward.2} parent=1 // pred_fallthru
      _
    %1022 = vsyncpa [#allocation3], 1
    %1023 = vsyncpa [#allocation5], 1

</llo_original>
